<compile_context>
chip_gen: v7x
topology: tpu7x:2x2x1
jax: 0.10.0
libtpu: 0.0.40
codegen_flags: <defaults>
</compile_context>

<pallas_src>
import numpy as np
import jax
import jax.numpy as jnp
from jax.experimental import pallas as pl
from jax.experimental.pallas import tpu as pltpu

# ----------------------- config (ctx equivalents) -----------------------
BATCH = 2
SEQ = 16                 # ctx.model.sequence_length
FEATURES = 8             # ctx.model.features
FF_FACTOR = 2.0          # ctx.model.feed_forward_intermediate_factor
INTER = int(FEATURES * FF_FACTOR)   # intermediate = 16
KERNEL_SIZE = 3          # ctx.model.conv_kernel_size
CLASSES = 11             # ctx.dataset.classes
DEPTH = 1                # ctx.model.depth
BETA = 0.9               # ctx.model.momentumnet_beta
ACT_STD = 0.5            # ctx.model.activation_std
EMB_STD = 1.0            # ctx.model.input_embedding_std
NEG_SLOPE = 0.02


# ----------------------- shared math helpers -----------------------
def _leaky(v):
    return jnp.where(v >= 0, v, NEG_SLOPE * v)


def _norm_ref(v):
    """norm() from the PyTorch code (channels on the last axis)."""
    c = v.shape[-1]
    v = v - jnp.mean(v, axis=-1, keepdims=True)
    n = jnp.sqrt(jnp.sum(v * v, axis=-1, keepdims=True))
    return v / (n * (c ** -0.5) + 1e-5)


def _norm_kernel(v):
    """Same math as _norm_ref, but multiply-by-reciprocal instead of divide."""
    c = v.shape[-1]
    v = v - jnp.mean(v, axis=-1, keepdims=True)
    n = jnp.sqrt(jnp.sum(v * v, axis=-1, keepdims=True))
    return v * pl.reciprocal(n * (c ** -0.5) + 1e-5)


# ----------------------- fused Pallas kernel -----------------------
def _fused_model_kernel(coef_ref, x0_ref, x1_ref, acc_ref, shift_ref,
                        w0_ref, w1_ref, w2_ref, ow0_ref, ow1_ref, ob_ref,
                        logits_ref, x0_out_ref, x1_out_ref):
    """Whole-model forward (stem + couplings + output conv) in one invocation.

    coef_ref : SMEM (2*DEPTH,)   [init_scale_i, beta**i] per depth step
    x0_ref   : (B*S, F)          first embedding half (batch-major flattened)
    x1_ref   : (B*S, F)          second embedding half
    acc_ref  : (B*S, B*S)        block-diag lower-tri cumsum operator, pre-divided
                                 by the positional divisor (cumsum/div == 1 matmul)
    shift_ref: (K-1, B*S, B*S)   block-diag causal shift-by-d operators (d=1..K-1)
    w0_ref   : (3, F, I)         w0_gate 1x1 conv, split per output chunk
    w1_ref   : (3, K*I, I)       causal conv taps, im2col (delay-major), per chunk
    w2_ref   : (I, F)            w2_gate 1x1 conv
    ow0_ref  : (F, CLASSES)      output conv weight rows for stem half x0
    ow1_ref  : (F, CLASSES)      output conv weight rows for stem half x1
    ob_ref   : (1, CLASSES)      output conv bias
    logits_ref     : (B*S, CLASSES)  flat output slab
    x0_out_ref/...: (B*S, F)         final stem halves (exposed for validation)
    """
    inter = w2_ref.shape[0]
    k_size = w1_ref.shape[1] // inter

    x0 = x0_ref[...]
    x1 = x1_ref[...]
    acc = acc_ref[...]
    w2 = w2_ref[...]

    def cell(v, init_scale):
        # moe_check -> drop_conv (1x1 conv): three chunk-separated MXU matmuls,
        # so the packed (S, 3I) activation is never lane-sliced.
        dep = jnp.dot(v, w0_ref[0], preferred_element_type=jnp.float32)
        scl = jnp.dot(v, w0_ref[1], preferred_element_type=jnp.float32)
        shf = jnp.dot(v, w0_ref[2], preferred_element_type=jnp.float32)
        # cumsum over the sequence fused with the divide-by-position: a single
        # matmul against the precomputed block-diagonal tril/divisor operator.
        cum = jnp.dot(acc, dep, preferred_element_type=jnp.float32)
        t = _leaky(_norm_kernel(cum * scl + shf))
        # causal conv (left pad K-1) via im2col: K causally-shifted copies of t
        # (block-diagonal shift operators keep batch elements separate),
        # concatenated along lanes, then one matmul per output chunk.
        cols = [t]
        for d in range(1, k_size):
            cols.append(jnp.dot(shift_ref[d - 1], t,
                                preferred_element_type=jnp.float32))
        tcat = jnp.concatenate(cols, axis=-1)                 # (B*S, K*I)
        s0 = jnp.dot(tcat, w1_ref[0], preferred_element_type=jnp.float32)
        s1 = jnp.dot(tcat, w1_ref[1], preferred_element_type=jnp.float32)
        sh = jnp.dot(tcat, w1_ref[2], preferred_element_type=jnp.float32)
        t2 = _leaky(_norm_kernel(s0 * s1 + sh))
        # second moe_check -> 1x1 conv, scaled by init_scale (momentum coupling)
        return jnp.dot(t2, w2, preferred_element_type=jnp.float32) * init_scale

    # revlib additive coupling + MomentumNetSide, unrolled over depth.
    depth = coef_ref.shape[0] // 2
    for i in range(depth):
        init_scale = coef_ref[2 * i]
        beta_i = coef_ref[2 * i + 1]
        c = cell(x1, init_scale)
        x0, x1 = x1, x0 + c
        x0, x1 = x1, x0 + beta_i * x1

    x0_out_ref[...] = x0
    x1_out_ref[...] = x1
    # final output 1x1 conv fused into the epilogue; weight split per stem half
    # so no (B*S, 2F) concat is needed. Single flat (B*S, classes) slab store.
    logits_ref[...] = (
        jnp.dot(x0, ow0_ref[...], preferred_element_type=jnp.float32)
        + jnp.dot(x1, ow1_ref[...], preferred_element_type=jnp.float32)
        + ob_ref[...])


# ----------------------- Pallas wrapper -----------------------
def fused_forward(x0, x1, p):
    """One pallas_call for the whole forward; whole problem fits one block."""
    bs, feat = x0.shape
    n_cls = p["ow0"].shape[1]

    def vspec(shape):
        return pl.BlockSpec(shape, lambda i: (0,) * len(shape))

    return pl.pallas_call(
        _fused_model_kernel,
        grid=(1,),
        in_specs=[
            pl.BlockSpec(memory_space=pltpu.MemorySpace.SMEM),   # coef scalars
            vspec((bs, feat)),                                   # x0
            vspec((bs, feat)),                                   # x1
            vspec(p["acc_mat"].shape),                           # cumsum/div op
            vspec(p["shift_mats"].shape),                        # causal shifts
            vspec(p["w0_3"].shape),
            vspec(p["w1_3"].shape),
            vspec(p["w2g"].shape),
            vspec(p["ow0"].shape),
            vspec(p["ow1"].shape),
            vspec(p["out_b"].shape),
        ],
        out_specs=(
            vspec((bs, n_cls)),
            vspec((bs, feat)),
            vspec((bs, feat)),
        ),
        out_shape=(
            jax.ShapeDtypeStruct((bs, n_cls), jnp.float32),
            jax.ShapeDtypeStruct((bs, feat), jnp.float32),
            jax.ShapeDtypeStruct((bs, feat), jnp.float32),
        ),
        compiler_params=pltpu.CompilerParams(
            dimension_semantics=("arbitrary",)),
    )(p["coef"], x0, x1, p["acc_mat"], p["shift_mats"], p["w0_3"], p["w1_3"],
      p["w2g"], p["ow0"], p["ow1"], p["out_b"])


# ----------------------- full model forward -----------------------
def model_forward(tokens, p):
    b, s = tokens.shape
    emb = p["embedding"][tokens]                         # gather: plain-JAX glue
    x0 = emb[..., :FEATURES].reshape(b * s, FEATURES)
    x1 = emb[..., FEATURES:].reshape(b * s, FEATURES)
    logits, _, _ = fused_forward(x0, x1, p)              # (b*s, classes) flat slab
    # layout-only relayout back to the PyTorch module's NCS output (B, classes, S)
    return jnp.transpose(logits.reshape(b, s, CLASSES), (0, 2, 1))


# ----------------------- pure-JAX reference -----------------------
def _cell_ref(x, p, init_scale):
    _, s, _ = x.shape
    h = jnp.einsum("bsf,fi->bsi", x, p["w0g"])
    depth, scale, shift = (h[..., :INTER], h[..., INTER:2 * INTER], h[..., 2 * INTER:])
    cum = jnp.cumsum(depth, axis=1)
    t = _leaky(_norm_ref(cum / p["divisor"] * scale + shift))
    padded = jnp.pad(t, ((0, 0), (KERNEL_SIZE - 1, 0), (0, 0)))
    y = jnp.zeros((x.shape[0], s, 3 * INTER), jnp.float32)
    for k in range(KERNEL_SIZE):
        y = y + jnp.einsum("bsi,io->bso", padded[:, k:k + s, :], p["w1taps"][k])
    s0, s1, sh = y[..., :INTER], y[..., INTER:2 * INTER], y[..., 2 * INTER:]
    t2 = _leaky(_norm_ref(s0 * s1 + sh))
    return jnp.einsum("bsi,if->bsf", t2, p["w2g"]) * init_scale


def stem_ref(tokens, p):
    emb = p["embedding"][tokens]
    x0, x1 = emb[..., :FEATURES], emb[..., FEATURES:]
    for i in range(1, DEPTH + 1):
        init_scale = (1.0 - BETA) / BETA ** i
        c = _cell_ref(x1, p, init_scale)
        x0, x1 = x1, x0 + c
        x0, x1 = x1, x0 + (BETA ** i) * x1
    return x0, x1


def model_forward_ref(tokens, p):
    x0, x1 = stem_ref(tokens, p)
    stem = jnp.concatenate([x0, x1], axis=-1)
    out = jnp.einsum("bsc,co->bso", stem, p["out_w"]) + p["out_b"][0]
    return jnp.transpose(out, (0, 2, 1))


# ----------------------- deterministic parameter init -----------------------
def _orthonormal_np(rng, shape, gain):
    flat = (shape[0], int(np.prod(shape[1:])))
    a = rng.random(flat).astype(np.float32)           # torch.rand
    u, _, vh = np.linalg.svd(a, full_matrices=False)
    w = u if u.shape == flat else vh
    return (w.reshape(shape) * gain).astype(np.float32)


def init_params(seed=0):
    rng = np.random.default_rng(seed)
    p = {}
    p["embedding"] = jnp.asarray(
        _orthonormal_np(rng, (CLASSES, 2 * FEATURES), EMB_STD * 2 ** -0.5))

    # conv_weight(...) shapes as in torch, re-laid out for MXU matmuls.
    w0_gate = _orthonormal_np(rng, (3 * INTER, FEATURES, 1), 1.0)             # (3I, F, 1)
    w1 = _orthonormal_np(rng, (3 * INTER, INTER, KERNEL_SIZE), 1.0 / ACT_STD)  # (3I, I, K)
    w2_gate = _orthonormal_np(rng, (FEATURES, INTER, 1), 1.0)                 # (F, I, 1)

    w0g = w0_gate[:, :, 0].T                               # (F, 3I)
    w1_taps = np.transpose(w1, (2, 1, 0))                  # (K, I, 3I) tap-major
    w2g = w2_gate[:, :, 0].T                               # (I, F)
    p["w0g"] = jnp.asarray(w0g)                            # reference layouts
    p["w1taps"] = jnp.asarray(w1_taps)
    p["w2g"] = jnp.asarray(w2g)

    # kernel layouts: split the packed 3I outputs into per-chunk weights (no
    # lane slicing in-kernel) and build the delay-major im2col w1 slabs.
    p["w0_3"] = jnp.asarray(np.stack(
        [w0g[:, c * INTER:(c + 1) * INTER] for c in range(3)]))          # (3, F, I)
    w1_cat = np.ascontiguousarray(w1_taps[::-1]).reshape(
        KERNEL_SIZE * INTER, 3 * INTER)                                  # rows: delay-major
    p["w1_3"] = jnp.asarray(np.stack(
        [w1_cat[:, c * INTER:(c + 1) * INTER] for c in range(3)]))       # (3, K*I, I)

    # output Conv1d: weight zeroed in the PyTorch module, default-init bias.
    out_w = np.zeros((2 * FEATURES, CLASSES), np.float32)
    p["out_w"] = jnp.asarray(out_w)
    p["ow0"] = jnp.asarray(out_w[:FEATURES])
    p["ow1"] = jnp.asarray(out_w[FEATURES:])
    bound = 1.0 / np.sqrt(2 * FEATURES)
    p["out_b"] = jnp.asarray(
        rng.uniform(-bound, bound, (1, CLASSES)).astype(np.float32))

    # registered divisor buffer (reference layout): arange(S)+1 as (1, S, 1)
    p["divisor"] = jnp.asarray(
        (np.arange(SEQ) + 1).astype(np.float32).reshape(1, SEQ, 1))

    # precomputed in-kernel operators (host-side, per perf feedback): the
    # block-diagonal tril/divisor cumsum matrix and the causal shift matrices.
    tri = np.tril(np.ones((SEQ, SEQ), np.float32))
    a_blk = tri / (np.arange(SEQ, dtype=np.float32) + 1.0)[:, None]
    p["acc_mat"] = jnp.asarray(
        np.kron(np.eye(BATCH, dtype=np.float32), a_blk).astype(np.float32))
    shift_mats = np.zeros((KERNEL_SIZE - 1, BATCH * SEQ, BATCH * SEQ), np.float32)
    for d in range(1, KERNEL_SIZE):
        blk = np.eye(SEQ, k=-d, dtype=np.float32)          # shift-down-by-d
        shift_mats[d - 1] = np.kron(np.eye(BATCH, dtype=np.float32), blk)
    p["shift_mats"] = jnp.asarray(shift_mats)

    # per-depth (init_scale, beta**i) scalars, read from SMEM by the kernel
    coef = []
    for i in range(1, DEPTH + 1):
        coef += [(1.0 - BETA) / BETA ** i, BETA ** i]
    p["coef"] = jnp.asarray(np.asarray(coef, np.float32))
    return p


# ----------------------- main -----------------------
if __name__ == "__main__":
    params = init_params(0)
    key = jax.random.PRNGKey(0)
    tokens = jax.random.randint(key, (BATCH, SEQ), 0, CLASSES)

    # full module forward through the single fused Pallas kernel
    fwd = jax.jit(lambda t: model_forward(t, params))
    out = jax.block_until_ready(fwd(tokens))                 # (B, classes, S)
    assert out.shape == (BATCH, CLASSES, SEQ)

    # validate the fused kernel's stem halves (the module's output conv weight is
    # zero-initialized, so the stem is the meaningful numerical check).
    emb = params["embedding"][tokens]
    x0f = emb[..., :FEATURES].reshape(BATCH * SEQ, FEATURES)
    x1f = emb[..., FEATURES:].reshape(BATCH * SEQ, FEATURES)
    _, x0_k, x1_k = jax.block_until_ready(fused_forward(x0f, x1f, params))
    x0_r, x1_r = stem_ref(tokens, params)
    np.testing.assert_allclose(
        np.asarray(x0_k), np.asarray(x0_r).reshape(BATCH * SEQ, FEATURES),
        rtol=1e-4, atol=1e-4)
    np.testing.assert_allclose(
        np.asarray(x1_k), np.asarray(x1_r).reshape(BATCH * SEQ, FEATURES),
        rtol=1e-4, atol=1e-4)

    # and the full forward against the pure-JAX reference
    ref = model_forward_ref(tokens, params)
    np.testing.assert_allclose(np.asarray(out), np.asarray(ref),
                               rtol=1e-4, atol=1e-4)

    print("KERNEL_OK")
</pallas_src>

<mosaic_0001>
module attributes {stable_mosaic.version = 11 : i64} {
  func.func @_fused_model_kernel(%arg0: i32, %arg1: memref<2xf32, #tpu.memory_space<smem>>, %arg2: memref<32x8xf32, #tpu.memory_space<vmem>>, %arg3: memref<32x8xf32, #tpu.memory_space<vmem>>, %arg4: memref<32x32xf32, #tpu.memory_space<vmem>>, %arg5: memref<2x32x32xf32, #tpu.memory_space<vmem>>, %arg6: memref<3x8x16xf32, #tpu.memory_space<vmem>>, %arg7: memref<3x48x16xf32, #tpu.memory_space<vmem>>, %arg8: memref<16x8xf32, #tpu.memory_space<vmem>>, %arg9: memref<8x11xf32, #tpu.memory_space<vmem>>, %arg10: memref<8x11xf32, #tpu.memory_space<vmem>>, %arg11: memref<1x11xf32, #tpu.memory_space<vmem>>, %arg12: memref<32x11xf32, #tpu.memory_space<vmem>>, %arg13: memref<32x8xf32, #tpu.memory_space<vmem>>, %arg14: memref<32x8xf32, #tpu.memory_space<vmem>>) attributes {dimension_semantics = [#tpu.dimension_semantics<arbitrary>], iteration_bounds = array<i64: 1>, scalar_prefetch = 0 : i64, scratch_operands = 0 : i64, tpu.core_type = #tpu.core_type<tc>, window_params = [{transform_indices = @transform_0, window_bounds = array<i64: 2>}, {pipeline_mode = #tpu.pipeline_mode<synchronous>, transform_indices = @transform_1, window_bounds = array<i64: 32, 8>}, {pipeline_mode = #tpu.pipeline_mode<synchronous>, transform_indices = @transform_2, window_bounds = array<i64: 32, 8>}, {pipeline_mode = #tpu.pipeline_mode<synchronous>, transform_indices = @transform_3, window_bounds = array<i64: 32, 32>}, {pipeline_mode = #tpu.pipeline_mode<synchronous>, transform_indices = @transform_4, window_bounds = array<i64: 2, 32, 32>}, {pipeline_mode = #tpu.pipeline_mode<synchronous>, transform_indices = @transform_5, window_bounds = array<i64: 3, 8, 16>}, {pipeline_mode = #tpu.pipeline_mode<synchronous>, transform_indices = @transform_6, window_bounds = array<i64: 3, 48, 16>}, {pipeline_mode = #tpu.pipeline_mode<synchronous>, transform_indices = @transform_7, window_bounds = array<i64: 16, 8>}, {pipeline_mode = #tpu.pipeline_mode<synchronous>, transform_indices = @transform_8, window_bounds = array<i64: 8, 11>}, {pipeline_mode = #tpu.pipeline_mode<synchronous>, transform_indices = @transform_9, window_bounds = array<i64: 8, 11>}, {pipeline_mode = #tpu.pipeline_mode<synchronous>, transform_indices = @transform_10, window_bounds = array<i64: 1, 11>}, {pipeline_mode = #tpu.pipeline_mode<synchronous>, transform_indices = @transform_11, window_bounds = array<i64: 32, 11>}, {pipeline_mode = #tpu.pipeline_mode<synchronous>, transform_indices = @transform_12, window_bounds = array<i64: 32, 8>}, {pipeline_mode = #tpu.pipeline_mode<synchronous>, transform_indices = @transform_13, window_bounds = array<i64: 32, 8>}]} {
    %c0 = arith.constant 0 : index
    %c0_0 = arith.constant 0 : index
    %0 = vector.load %arg2[%c0, %c0_0] : memref<32x8xf32, #tpu.memory_space<vmem>>, vector<32x8xf32>
    %c0_1 = arith.constant 0 : index
    %c0_2 = arith.constant 0 : index
    %1 = vector.load %arg3[%c0_1, %c0_2] : memref<32x8xf32, #tpu.memory_space<vmem>>, vector<32x8xf32>
    %c0_3 = arith.constant 0 : index
    %c0_4 = arith.constant 0 : index
    %2 = vector.load %arg4[%c0_3, %c0_4] : memref<32x32xf32, #tpu.memory_space<vmem>>, vector<32x32xf32>
    %c0_5 = arith.constant 0 : index
    %c0_6 = arith.constant 0 : index
    %3 = vector.load %arg8[%c0_5, %c0_6] : memref<16x8xf32, #tpu.memory_space<vmem>>, vector<16x8xf32>
    %c0_7 = arith.constant 0 : index
    %4 = memref.load %arg1[%c0_7] : memref<2xf32, #tpu.memory_space<smem>>
    %c1 = arith.constant 1 : index
    %5 = memref.load %arg1[%c1] : memref<2xf32, #tpu.memory_space<smem>>
    %c0_8 = arith.constant 0 : index
    %c0_9 = arith.constant 0 : index
    %c0_10 = arith.constant 0 : index
    %6 = vector.load %arg6[%c0_8, %c0_9, %c0_10] : memref<3x8x16xf32, #tpu.memory_space<vmem>>, vector<1x8x16xf32>
    %7 = vector.shape_cast %6 : vector<1x8x16xf32> to vector<8x16xf32>
    %cst = arith.constant dense<0.000000e+00> : vector<32x16xf32>
    %8 = tpu.matmul %1, %7, %cst {dimension_numbers = #tpu.dot_dimension_numbers<[1], [0], [0], [1], [0, 0, 1, 1], [], []>} : vector<32x8xf32>, vector<8x16xf32>, vector<32x16xf32> -> vector<32x16xf32>
    %c1_11 = arith.constant 1 : index
    %c0_12 = arith.constant 0 : index
    %c0_13 = arith.constant 0 : index
    %9 = vector.load %arg6[%c1_11, %c0_12, %c0_13] : memref<3x8x16xf32, #tpu.memory_space<vmem>>, vector<1x8x16xf32>
    %10 = vector.shape_cast %9 : vector<1x8x16xf32> to vector<8x16xf32>
    %cst_14 = arith.constant dense<0.000000e+00> : vector<32x16xf32>
    %11 = tpu.matmul %1, %10, %cst_14 {dimension_numbers = #tpu.dot_dimension_numbers<[1], [0], [0], [1], [0, 0, 1, 1], [], []>} : vector<32x8xf32>, vector<8x16xf32>, vector<32x16xf32> -> vector<32x16xf32>
    %c2 = arith.constant 2 : index
    %c0_15 = arith.constant 0 : index
    %c0_16 = arith.constant 0 : index
    %12 = vector.load %arg6[%c2, %c0_15, %c0_16] : memref<3x8x16xf32, #tpu.memory_space<vmem>>, vector<1x8x16xf32>
    %13 = vector.shape_cast %12 : vector<1x8x16xf32> to vector<8x16xf32>
    %cst_17 = arith.constant dense<0.000000e+00> : vector<32x16xf32>
    %14 = tpu.matmul %1, %13, %cst_17 {dimension_numbers = #tpu.dot_dimension_numbers<[1], [0], [0], [1], [0, 0, 1, 1], [], []>} : vector<32x8xf32>, vector<8x16xf32>, vector<32x16xf32> -> vector<32x16xf32>
    %cst_18 = arith.constant dense<0.000000e+00> : vector<32x16xf32>
    %15 = tpu.matmul %2, %8, %cst_18 {dimension_numbers = #tpu.dot_dimension_numbers<[1], [0], [0], [1], [0, 0, 1, 1], [], []>} : vector<32x32xf32>, vector<32x16xf32>, vector<32x16xf32> -> vector<32x16xf32>
    %16 = arith.mulf %15, %11 : vector<32x16xf32>
    %17 = arith.addf %16, %14 : vector<32x16xf32>
    %cst_19 = arith.constant dense<0.000000e+00> : vector<32xf32>
    %18 = vector.multi_reduction <add>, %17, %cst_19 [1] : vector<32x16xf32> to vector<32xf32>
    %19 = vector.shape_cast %18 : vector<32xf32> to vector<32x1xf32>
    %cst_20 = arith.constant 1.600000e+01 : f32
    %20 = vector.broadcast %cst_20 : f32 to vector<32x1xf32>
    %21 = arith.divf %19, %20 : vector<32x1xf32>
    %22 = vector.broadcast %21 : vector<32x1xf32> to vector<32x16xf32>
    %23 = arith.subf %17, %22 : vector<32x16xf32>
    %24 = arith.mulf %23, %23 : vector<32x16xf32>
    %cst_21 = arith.constant dense<0.000000e+00> : vector<32xf32>
    %25 = vector.multi_reduction <add>, %24, %cst_21 [1] : vector<32x16xf32> to vector<32xf32>
    %26 = vector.shape_cast %25 : vector<32xf32> to vector<32x1xf32>
    %27 = math.sqrt %26 : vector<32x1xf32>
    %cst_22 = arith.constant 2.500000e-01 : f32
    %28 = vector.broadcast %cst_22 : f32 to vector<32x1xf32>
    %29 = arith.mulf %27, %28 : vector<32x1xf32>
    %cst_23 = arith.constant 9.99999974E-6 : f32
    %30 = vector.broadcast %cst_23 : f32 to vector<32x1xf32>
    %31 = arith.addf %29, %30 : vector<32x1xf32>
    %32 = tpu.reciprocal %31 : vector<32x1xf32> -> vector<32x1xf32>
    %33 = vector.broadcast %32 : vector<32x1xf32> to vector<32x16xf32>
    %34 = arith.mulf %23, %33 : vector<32x16xf32>
    %cst_24 = arith.constant 0.000000e+00 : f32
    %35 = vector.broadcast %cst_24 : f32 to vector<32x16xf32>
    %36 = arith.cmpf oge, %34, %35 : vector<32x16xf32>
    %cst_25 = arith.constant 2.000000e-02 : f32
    %37 = vector.broadcast %cst_25 : f32 to vector<32x16xf32>
    %38 = arith.mulf %37, %34 : vector<32x16xf32>
    %39 = arith.select %36, %34, %38 : vector<32x16xi1>, vector<32x16xf32>
    %c0_26 = arith.constant 0 : index
    %c0_27 = arith.constant 0 : index
    %c0_28 = arith.constant 0 : index
    %40 = vector.load %arg5[%c0_26, %c0_27, %c0_28] : memref<2x32x32xf32, #tpu.memory_space<vmem>>, vector<1x32x32xf32>
    %41 = vector.shape_cast %40 : vector<1x32x32xf32> to vector<32x32xf32>
    %cst_29 = arith.constant dense<0.000000e+00> : vector<32x16xf32>
    %42 = tpu.matmul %41, %39, %cst_29 {dimension_numbers = #tpu.dot_dimension_numbers<[1], [0], [0], [1], [0, 0, 1, 1], [], []>} : vector<32x32xf32>, vector<32x16xf32>, vector<32x16xf32> -> vector<32x16xf32>
    %c1_30 = arith.constant 1 : index
    %c0_31 = arith.constant 0 : index
    %c0_32 = arith.constant 0 : index
    %43 = vector.load %arg5[%c1_30, %c0_31, %c0_32] : memref<2x32x32xf32, #tpu.memory_space<vmem>>, vector<1x32x32xf32>
    %44 = vector.shape_cast %43 : vector<1x32x32xf32> to vector<32x32xf32>
    %cst_33 = arith.constant dense<0.000000e+00> : vector<32x16xf32>
    %45 = tpu.matmul %44, %39, %cst_33 {dimension_numbers = #tpu.dot_dimension_numbers<[1], [0], [0], [1], [0, 0, 1, 1], [], []>} : vector<32x32xf32>, vector<32x16xf32>, vector<32x16xf32> -> vector<32x16xf32>
    %46 = tpu.concatenate %39, %42, %45 in 1 : vector<32x16xf32>, vector<32x16xf32>, vector<32x16xf32> -> vector<32x48xf32>
    %c0_34 = arith.constant 0 : index
    %c0_35 = arith.constant 0 : index
    %c0_36 = arith.constant 0 : index
    %47 = vector.load %arg7[%c0_34, %c0_35, %c0_36] : memref<3x48x16xf32, #tpu.memory_space<vmem>>, vector<1x48x16xf32>
    %48 = vector.shape_cast %47 : vector<1x48x16xf32> to vector<48x16xf32>
    %cst_37 = arith.constant dense<0.000000e+00> : vector<32x16xf32>
    %49 = tpu.matmul %46, %48, %cst_37 {dimension_numbers = #tpu.dot_dimension_numbers<[1], [0], [0], [1], [0, 0, 1, 1], [], []>} : vector<32x48xf32>, vector<48x16xf32>, vector<32x16xf32> -> vector<32x16xf32>
    %c1_38 = arith.constant 1 : index
    %c0_39 = arith.constant 0 : index
    %c0_40 = arith.constant 0 : index
    %50 = vector.load %arg7[%c1_38, %c0_39, %c0_40] : memref<3x48x16xf32, #tpu.memory_space<vmem>>, vector<1x48x16xf32>
    %51 = vector.shape_cast %50 : vector<1x48x16xf32> to vector<48x16xf32>
    %cst_41 = arith.constant dense<0.000000e+00> : vector<32x16xf32>
    %52 = tpu.matmul %46, %51, %cst_41 {dimension_numbers = #tpu.dot_dimension_numbers<[1], [0], [0], [1], [0, 0, 1, 1], [], []>} : vector<32x48xf32>, vector<48x16xf32>, vector<32x16xf32> -> vector<32x16xf32>
    %c2_42 = arith.constant 2 : index
    %c0_43 = arith.constant 0 : index
    %c0_44 = arith.constant 0 : index
    %53 = vector.load %arg7[%c2_42, %c0_43, %c0_44] : memref<3x48x16xf32, #tpu.memory_space<vmem>>, vector<1x48x16xf32>
    %54 = vector.shape_cast %53 : vector<1x48x16xf32> to vector<48x16xf32>
    %cst_45 = arith.constant dense<0.000000e+00> : vector<32x16xf32>
    %55 = tpu.matmul %46, %54, %cst_45 {dimension_numbers = #tpu.dot_dimension_numbers<[1], [0], [0], [1], [0, 0, 1, 1], [], []>} : vector<32x48xf32>, vector<48x16xf32>, vector<32x16xf32> -> vector<32x16xf32>
    %56 = arith.mulf %49, %52 : vector<32x16xf32>
    %57 = arith.addf %56, %55 : vector<32x16xf32>
    %cst_46 = arith.constant dense<0.000000e+00> : vector<32xf32>
    %58 = vector.multi_reduction <add>, %57, %cst_46 [1] : vector<32x16xf32> to vector<32xf32>
    %59 = vector.shape_cast %58 : vector<32xf32> to vector<32x1xf32>
    %cst_47 = arith.constant 1.600000e+01 : f32
    %60 = vector.broadcast %cst_47 : f32 to vector<32x1xf32>
    %61 = arith.divf %59, %60 : vector<32x1xf32>
    %62 = vector.broadcast %61 : vector<32x1xf32> to vector<32x16xf32>
    %63 = arith.subf %57, %62 : vector<32x16xf32>
    %64 = arith.mulf %63, %63 : vector<32x16xf32>
    %cst_48 = arith.constant dense<0.000000e+00> : vector<32xf32>
    %65 = vector.multi_reduction <add>, %64, %cst_48 [1] : vector<32x16xf32> to vector<32xf32>
    %66 = vector.shape_cast %65 : vector<32xf32> to vector<32x1xf32>
    %67 = math.sqrt %66 : vector<32x1xf32>
    %cst_49 = arith.constant 2.500000e-01 : f32
    %68 = vector.broadcast %cst_49 : f32 to vector<32x1xf32>
    %69 = arith.mulf %67, %68 : vector<32x1xf32>
    %cst_50 = arith.constant 9.99999974E-6 : f32
    %70 = vector.broadcast %cst_50 : f32 to vector<32x1xf32>
    %71 = arith.addf %69, %70 : vector<32x1xf32>
    %72 = tpu.reciprocal %71 : vector<32x1xf32> -> vector<32x1xf32>
    %73 = vector.broadcast %72 : vector<32x1xf32> to vector<32x16xf32>
    %74 = arith.mulf %63, %73 : vector<32x16xf32>
    %cst_51 = arith.constant 0.000000e+00 : f32
    %75 = vector.broadcast %cst_51 : f32 to vector<32x16xf32>
    %76 = arith.cmpf oge, %74, %75 : vector<32x16xf32>
    %cst_52 = arith.constant 2.000000e-02 : f32
    %77 = vector.broadcast %cst_52 : f32 to vector<32x16xf32>
    %78 = arith.mulf %77, %74 : vector<32x16xf32>
    %79 = arith.select %76, %74, %78 : vector<32x16xi1>, vector<32x16xf32>
    %cst_53 = arith.constant dense<0.000000e+00> : vector<32x8xf32>
    %80 = tpu.matmul %79, %3, %cst_53 {dimension_numbers = #tpu.dot_dimension_numbers<[1], [0], [0], [1], [0, 0, 1, 1], [], []>} : vector<32x16xf32>, vector<16x8xf32>, vector<32x8xf32> -> vector<32x8xf32>
    %81 = vector.broadcast %4 : f32 to vector<32x8xf32>
    %82 = arith.mulf %80, %81 : vector<32x8xf32>
    %83 = arith.addf %0, %82 : vector<32x8xf32>
    %84 = vector.broadcast %5 : f32 to vector<32x8xf32>
    %85 = arith.mulf %84, %83 : vector<32x8xf32>
    %86 = arith.addf %1, %85 : vector<32x8xf32>
    %c0_54 = arith.constant 0 : index
    %c0_55 = arith.constant 0 : index
    %87 = vector.load %arg13[%c0_54, %c0_55] : memref<32x8xf32, #tpu.memory_space<vmem>>, vector<32x8xf32>
    tpu.vector_store %arg13[%c0_54, %c0_55], %83 {strides = array<i32>} : memref<32x8xf32, #tpu.memory_space<vmem>>, vector<32x8xf32>,
    %c0_56 = arith.constant 0 : index
    %c0_57 = arith.constant 0 : index
    %88 = vector.load %arg14[%c0_56, %c0_57] : memref<32x8xf32, #tpu.memory_space<vmem>>, vector<32x8xf32>
    tpu.vector_store %arg14[%c0_56, %c0_57], %86 {strides = array<i32>} : memref<32x8xf32, #tpu.memory_space<vmem>>, vector<32x8xf32>,
    %c0_58 = arith.constant 0 : index
    %c0_59 = arith.constant 0 : index
    %89 = vector.load %arg9[%c0_58, %c0_59] : memref<8x11xf32, #tpu.memory_space<vmem>>, vector<8x11xf32>
    %cst_60 = arith.constant dense<0.000000e+00> : vector<32x11xf32>
    %90 = tpu.matmul %83, %89, %cst_60 {dimension_numbers = #tpu.dot_dimension_numbers<[1], [0], [0], [1], [0, 0, 1, 1], [], []>} : vector<32x8xf32>, vector<8x11xf32>, vector<32x11xf32> -> vector<32x11xf32>
    %c0_61 = arith.constant 0 : index
    %c0_62 = arith.constant 0 : index
    %91 = vector.load %arg10[%c0_61, %c0_62] : memref<8x11xf32, #tpu.memory_space<vmem>>, vector<8x11xf32>
    %cst_63 = arith.constant dense<0.000000e+00> : vector<32x11xf32>
    %92 = tpu.matmul %86, %91, %cst_63 {dimension_numbers = #tpu.dot_dimension_numbers<[1], [0], [0], [1], [0, 0, 1, 1], [], []>} : vector<32x8xf32>, vector<8x11xf32>, vector<32x11xf32> -> vector<32x11xf32>
    %93 = arith.addf %90, %92 : vector<32x11xf32>
    %c0_64 = arith.constant 0 : index
    %c0_65 = arith.constant 0 : index
    %94 = vector.load %arg11[%c0_64, %c0_65] : memref<1x11xf32, #tpu.memory_space<vmem>>, vector<1x11xf32>
    %95 = vector.broadcast %94 : vector<1x11xf32> to vector<32x11xf32>
    %96 = arith.addf %93, %95 : vector<32x11xf32>
    %c0_66 = arith.constant 0 : index
    %c0_67 = arith.constant 0 : index
    %97 = vector.load %arg12[%c0_66, %c0_67] : memref<32x11xf32, #tpu.memory_space<vmem>>, vector<32x11xf32>
    tpu.vector_store %arg12[%c0_66, %c0_67], %96 {strides = array<i32>} : memref<32x11xf32, #tpu.memory_space<vmem>>, vector<32x11xf32>,
    return
  }
  func.func @transform_0(%arg0: i32) -> i32 {
    %c0_i32 = arith.constant 0 : i32
    %c0_i32_0 = arith.constant 0 : i32
    return %c0_i32 : i32
  }
  func.func @transform_1(%arg0: i32) -> (i32, i32) {
    %c0_i32 = arith.constant 0 : i32
    %c0_i32_0 = arith.constant 0 : i32
    %c0_i32_1 = arith.constant 0 : i32
    return %c0_i32, %c0_i32_0 : i32, i32
  }
  func.func @transform_2(%arg0: i32) -> (i32, i32) {
    %c0_i32 = arith.constant 0 : i32
    %c0_i32_0 = arith.constant 0 : i32
    %c0_i32_1 = arith.constant 0 : i32
    return %c0_i32, %c0_i32_0 : i32, i32
  }
  func.func @transform_3(%arg0: i32) -> (i32, i32) {
    %c0_i32 = arith.constant 0 : i32
    %c0_i32_0 = arith.constant 0 : i32
    %c0_i32_1 = arith.constant 0 : i32
    return %c0_i32, %c0_i32_0 : i32, i32
  }
  func.func @transform_4(%arg0: i32) -> (i32, i32, i32) {
    %c0_i32 = arith.constant 0 : i32
    %c0_i32_0 = arith.constant 0 : i32
    %c0_i32_1 = arith.constant 0 : i32
    %c0_i32_2 = arith.constant 0 : i32
    return %c0_i32, %c0_i32_0, %c0_i32_1 : i32, i32, i32
  }
  func.func @transform_5(%arg0: i32) -> (i32, i32, i32) {
    %c0_i32 = arith.constant 0 : i32
    %c0_i32_0 = arith.constant 0 : i32
    %c0_i32_1 = arith.constant 0 : i32
    %c0_i32_2 = arith.constant 0 : i32
    return %c0_i32, %c0_i32_0, %c0_i32_1 : i32, i32, i32
  }
  func.func @transform_6(%arg0: i32) -> (i32, i32, i32) {
    %c0_i32 = arith.constant 0 : i32
    %c0_i32_0 = arith.constant 0 : i32
    %c0_i32_1 = arith.constant 0 : i32
    %c0_i32_2 = arith.constant 0 : i32
    return %c0_i32, %c0_i32_0, %c0_i32_1 : i32, i32, i32
  }
  func.func @transform_7(%arg0: i32) -> (i32, i32) {
    %c0_i32 = arith.constant 0 : i32
    %c0_i32_0 = arith.constant 0 : i32
    %c0_i32_1 = arith.constant 0 : i32
    return %c0_i32, %c0_i32_0 : i32, i32
  }
  func.func @transform_8(%arg0: i32) -> (i32, i32) {
    %c0_i32 = arith.constant 0 : i32
    %c0_i32_0 = arith.constant 0 : i32
    %c0_i32_1 = arith.constant 0 : i32
    return %c0_i32, %c0_i32_0 : i32, i32
  }
  func.func @transform_9(%arg0: i32) -> (i32, i32) {
    %c0_i32 = arith.constant 0 : i32
    %c0_i32_0 = arith.constant 0 : i32
    %c0_i32_1 = arith.constant 0 : i32
    return %c0_i32, %c0_i32_0 : i32, i32
  }
  func.func @transform_10(%arg0: i32) -> (i32, i32) {
    %c0_i32 = arith.constant 0 : i32
    %c0_i32_0 = arith.constant 0 : i32
    %c0_i32_1 = arith.constant 0 : i32
    return %c0_i32, %c0_i32_0 : i32, i32
  }
  func.func @transform_11(%arg0: i32) -> (i32, i32) {
    %c0_i32 = arith.constant 0 : i32
    %c0_i32_0 = arith.constant 0 : i32
    %c0_i32_1 = arith.constant 0 : i32
    return %c0_i32, %c0_i32_0 : i32, i32
  }
  func.func @transform_12(%arg0: i32) -> (i32, i32) {
    %c0_i32 = arith.constant 0 : i32
    %c0_i32_0 = arith.constant 0 : i32
    %c0_i32_1 = arith.constant 0 : i32
    return %c0_i32, %c0_i32_0 : i32, i32
  }
  func.func @transform_13(%arg0: i32) -> (i32, i32) {
    %c0_i32 = arith.constant 0 : i32
    %c0_i32_0 = arith.constant 0 : i32
    %c0_i32_1 = arith.constant 0 : i32
    return %c0_i32, %c0_i32_0 : i32, i32
  }
}

</mosaic_0001>

<llo_original>
// kernel: _lambda_.1
$region0: #{_lambda_.1}
  #allocation0 [shape = 'u32[]', space=smem, size = 0x4, offset = 0x4, fixed_abs, tag = 'smem constant byte address 0x4 - core index']
  #allocation1 [shape = 'u32[144,128]{1,0:T(1,128)}', space=vmem, size = 0x12000, scoped, tag = 'internal scratch']
  %s0 = inlined_call_operand.vmem [shape: f32[2], index: 0, kind: input, shape index: {}]
  %s1 = inlined_call_operand.vmem [shape: f32[32,8], index: 1, kind: input, shape index: {}]
  %s2 = inlined_call_operand.vmem [shape: f32[32,8], index: 2, kind: input, shape index: {}]
  %s3 = inlined_call_operand.vmem [shape: f32[32,32], index: 3, kind: input, shape index: {}]
  %s4 = inlined_call_operand.vmem [shape: f32[2,32,32], index: 4, kind: input, shape index: {}]
  %s5 = inlined_call_operand.vmem [shape: f32[3,8,16], index: 5, kind: input, shape index: {}]
  %s6 = inlined_call_operand.vmem [shape: f32[3,48,16], index: 6, kind: input, shape index: {}]
  %s7 = inlined_call_operand.vmem [shape: f32[16,8], index: 7, kind: input, shape index: {}]
  %s8 = inlined_call_operand.vmem [shape: f32[8,11], index: 8, kind: input, shape index: {}, may-alias: {8,9}]
  %s9 = inlined_call_operand.vmem [shape: f32[8,11], index: 9, kind: input, shape index: {}, may-alias: {8,9}]
  %s10 = inlined_call_operand.vmem [shape: f32[1,11], index: 10, kind: input, shape index: {}]
  %s11 = inlined_call_operand.vmem [shape: f32[32,11], index: 11, kind: output, shape index: {0}]
  %s12 = inlined_call_operand.hbm [shape: f32[32,8], index: 12, kind: output, shape index: {1}]
  %s13 = inlined_call_operand.hbm [shape: f32[32,8], index: 13, kind: output, shape index: {2}]
  %14 = xla_tuple %s11, %s12, %s13
  %s15 = sld [smem:[#allocation0]]
  $region74: #{_lambda_.1} parent=0
    _
  %s17 = ssub.s32 1, %s15
  %s18 = scalar_select 0, %s17, %s15
  $region1: #{_lambda_.1} parent=0
    #allocation2 [shape = 'u8[512]{0}', space=smem, size = 0x200, scoped, tag = 'input window, operand 0, single buffered']
    #allocation3 [shape = 's32[1]{0}', space=sflag, size = 0x4, scoped, tag = 'scoped memory for _lambda_.1']
    #allocation4 [shape = 's32[1]{0}', space=sflag, size = 0x4, scoped, tag = 'scoped memory for _lambda_.1']
    #allocation5 [shape = 'u8[16384]{0}', space=vmem, size = 0x4000, scoped, tag = 'output window, operand 1, single buffered']
    #allocation6 [shape = 'u8[16384]{0}', space=vmem, size = 0x4000, scoped, tag = 'output window, operand 2, single buffered']
    #allocation7 [shape = 's32[1]{0}', space=sflag, size = 0x4, scoped, tag = 'scoped memory for _lambda_.1']
    %19 = vsyncpa [#allocation4], 0
    %20 = vsyncpa [#allocation3], 0
    %21 = vsyncpa [#allocation7], 0
    // Predicated region
    $region2: #{_lambda_.1} parent=1 // pred_check
      _
    $region3: #{_lambda_.1} parent=1 // pred_check_branch
      %23 = sbr.rel (0) target = $region5
    $region4: #{_lambda_.1} parent=1 // pred_region
      %s25 = ssub.s32 16, 16
      %26 = vsyncadd [#allocation4], %s25
      %s28 = sshll.u32 %s0, 4
      %s29 = int_to_ptr.vmem [resolvable:$true] %s28
      %31 = dma.vmem_to_smem %s29, 16, [#allocation2], [#allocation4]
    $region5: #{_lambda_.1} parent=1 // pred_fallthru
      _
    // Predicated region
    $region6: #{_lambda_.1} parent=1 // pred_check
      _
    $region7: #{_lambda_.1} parent=1 // pred_check_branch
      %33 = sbr.rel (0) target = $region9
    $region8: #{_lambda_.1} parent=1 // pred_region
      _
    $region9: #{_lambda_.1} parent=1 // pred_fallthru
      _
    // Predicated region
    $region10: #{_lambda_.1} parent=1 // pred_check
      _
    $region11: #{_lambda_.1} parent=1 // pred_check_branch
      %35 = sbr.rel (0) target = $region13
    $region12: #{_lambda_.1} parent=1 // pred_region
      _
    $region13: #{_lambda_.1} parent=1 // pred_fallthru
      _
    // Predicated region
    $region14: #{_lambda_.1} parent=1 // pred_check
      _
    $region15: #{_lambda_.1} parent=1 // pred_check_branch
      %37 = sbr.rel (0) target = $region17
    $region16: #{_lambda_.1} parent=1 // pred_region
      _
    $region17: #{_lambda_.1} parent=1 // pred_fallthru
      _
    // Predicated region
    $region18: #{_lambda_.1} parent=1 // pred_check
      _
    $region19: #{_lambda_.1} parent=1 // pred_check_branch
      %39 = sbr.rel (0) target = $region21
    $region20: #{_lambda_.1} parent=1 // pred_region
      _
    $region21: #{_lambda_.1} parent=1 // pred_fallthru
      _
    // Predicated region
    $region22: #{_lambda_.1} parent=1 // pred_check
      _
    $region23: #{_lambda_.1} parent=1 // pred_check_branch
      %41 = sbr.rel (0) target = $region25
    $region24: #{_lambda_.1} parent=1 // pred_region
      _
    $region25: #{_lambda_.1} parent=1 // pred_fallthru
      _
    // Predicated region
    $region26: #{_lambda_.1} parent=1 // pred_check
      _
    $region27: #{_lambda_.1} parent=1 // pred_check_branch
      %43 = sbr.rel (0) target = $region29
    $region28: #{_lambda_.1} parent=1 // pred_region
      _
    $region29: #{_lambda_.1} parent=1 // pred_fallthru
      _
    // Predicated region
    $region30: #{_lambda_.1} parent=1 // pred_check
      _
    $region31: #{_lambda_.1} parent=1 // pred_check_branch
      %45 = sbr.rel (0) target = $region33
    $region32: #{_lambda_.1} parent=1 // pred_region
      _
    $region33: #{_lambda_.1} parent=1 // pred_fallthru
      _
    // Predicated region
    $region34: #{_lambda_.1} parent=1 // pred_check
      _
    $region35: #{_lambda_.1} parent=1 // pred_check_branch
      %47 = sbr.rel (0) target = $region37
    $region36: #{_lambda_.1} parent=1 // pred_region
      _
    $region37: #{_lambda_.1} parent=1 // pred_fallthru
      _
    // Predicated region
    $region38: #{_lambda_.1} parent=1 // pred_check
      _
    $region39: #{_lambda_.1} parent=1 // pred_check_branch
      %49 = sbr.rel (0) target = $region41
    $region40: #{_lambda_.1} parent=1 // pred_region
      _
    $region41: #{_lambda_.1} parent=1 // pred_fallthru
      _
    // Predicated region
    $region42: #{_lambda_.1} parent=1 // pred_check
      _
    $region43: #{_lambda_.1} parent=1 // pred_check_branch
      %51 = sbr.rel (0) target = $region45
    $region44: #{_lambda_.1} parent=1 // pred_region
      _
    $region45: #{_lambda_.1} parent=1 // pred_fallthru
      _
    // Predicated region
    $region46: #{_lambda_.1} parent=1 // pred_check
      _
    $region47: #{_lambda_.1} parent=1 // pred_check_branch
      %53 = sbr.rel (0) target = $region49
    $region48: #{_lambda_.1} parent=1 // pred_region
      %54 = dma.done [#allocation4], 16
    $region49: #{_lambda_.1} parent=1 // pred_fallthru
      _
    %55 = sfence
    %v56 = vld [vmem:[%s1] sm:$0xff]
    %v57 = vld [vmem:[%s1 + $0x8] sm:$0xff]
    %v58 = vld [vmem:[%s1 + $0x10] sm:$0xff]
    %v59 = vld [vmem:[%s1 + $0x18] sm:$0xff]
    %v60 = vld [vmem:[%s2] sm:$0xff]
    %v61 = vld [vmem:[%s2 + $0x8] sm:$0xff]
    %v62 = vld [vmem:[%s2 + $0x10] sm:$0xff]
    %v63 = vld [vmem:[%s2 + $0x18] sm:$0xff]
    %v64 = vld [vmem:[%s3] sm:$0xff]
    %v65 = vld [vmem:[%s3 + $0x8] sm:$0xff]
    %v66 = vld [vmem:[%s3 + $0x10] sm:$0xff]
    %v67 = vld [vmem:[%s3 + $0x18] sm:$0xff]
    %v68 = vld [vmem:[%s7] sm:$0xff]
    %v69 = vld [vmem:[%s7 + $0x8] sm:$0xff]
    %s70 = sld [smem:[#allocation2]]
    %s71 = sld [smem:[#allocation2 + $0x1]]
    %v72 = vld [vmem:[%s5] sm:$0xff]
    %vm73 = vcmask 64512
    %v75 = vsel %vm73, %v60, 0
    %v78 = vsel %vm73, %v61, 0
    %v81 = vsel %vm73, %v62, 0
    %v84 = vsel %vm73, %v63, 0
    %86 = vmatprep.subr.mxu0 0.0
    %87 = vmatpush1.msra.mxu0 %v72
    %88 = vmatprep.subr.mxu0 0.0
    %89 = vmatpush1.msra.mxu0 0.0
    %90 = vmatprep.subr.mxu0 0.0
    %91 = vmatpush1.msra.mxu0 0.0
    %92 = vmatprep.subr.mxu0 0.0
    %93 = vmatpush1.msra.mxu0 0.0
    %94 = vmatprep.subr.mxu0 0.0
    %95 = vmatpush1.msra.mxu0 0.0
    %96 = vmatprep.subr.mxu0 0.0
    %97 = vmatpush1.msra.mxu0 0.0
    %98 = vmatprep.subr.mxu0 0.0
    %99 = vmatpush1.msra.mxu0 0.0
    %100 = vmatprep.subr.mxu0 0.0
    %101 = vmatpush1.msra.mxu0 0.0
    %102 = vmatprep.subr.mxu0 0.0
    %103 = vmatpush1.msra.mxu0 0.0
    %104 = vmatprep.subr.mxu0 0.0
    %105 = vmatpush1.msra.mxu0 0.0
    %106 = vmatprep.subr.mxu0 0.0
    %107 = vmatpush1.msra.mxu0 0.0
    %108 = vmatprep.subr.mxu0 0.0
    %109 = vmatpush1.msra.mxu0 0.0
    %110 = vmatprep.subr.mxu0 0.0
    %111 = vmatpush1.msra.mxu0 0.0
    %112 = vmatprep.subr.mxu0 0.0
    %113 = vmatpush1.msra.mxu0 0.0
    %114 = vmatprep.subr.mxu0 0.0
    %115 = vmatpush1.msra.mxu0 0.0
    %116 = vmatprep.subr.mxu0 0.0
    %117 = vmatpush1.msra.mxu0 0.0
    %118 = vmatprep.subr.mxu0 0.0
    %119 = vmatpush1.msra.mxu0 0.0
    %120 = vmatprep.subr.mxu0 0.0
    %121 = vmatpush1.msra.mxu0 0.0
    %122 = vmatprep.subr.mxu0 0.0
    %123 = vmatpush1.msra.mxu0 0.0
    %124 = vmatprep.subr.mxu0 0.0
    %125 = vmatpush1.msra.mxu0 0.0
    %126 = vmatprep.subr.mxu0 0.0
    %127 = vmatpush1.msra.mxu0 0.0
    %128 = vmatprep.subr.mxu0 0.0
    %129 = vmatpush1.msra.mxu0 0.0
    %130 = vmatprep.subr.mxu0 0.0
    %131 = vmatpush1.msra.mxu0 0.0
    %132 = vmatprep.subr.mxu0 0.0
    %133 = vmatpush1.msra.mxu0 0.0
    %134 = vmatprep.subr.mxu0 0.0
    %135 = vmatpush1.msra.mxu0 0.0
    %136 = vmatprep.subr.mxu0 0.0
    %137 = vmatpush1.msra.mxu0 0.0
    %138 = vmatprep.subr.mxu0 0.0
    %139 = vmatpush1.msra.mxu0 0.0
    %140 = vmatprep.subr.mxu0 0.0
    %141 = vmatpush1.msra.mxu0 0.0
    %142 = vmatprep.subr.mxu0 0.0
    %143 = vmatpush1.msra.mxu0 0.0
    %144 = vmatprep.subr.mxu0 0.0
    %145 = vmatpush1.msra.mxu0 0.0
    %146 = vmatprep.subr.mxu0 0.0
    %147 = vmatpush1.msra.mxu0 0.0
    %148 = vmatprep.subr.mxu0 0.0
    %149 = vmatpush1.msra.mxu0 0.0
    %150 = vmatprep.mubr.f32.mxu0 0.0
    %151 = vmatmul.mubr.f32.gmra.mrb[0].mxu0 %v75
    %v152 = vpop.f32.mrb[0].mxu0
    %v153 = vadd.f32 0.0, %v152
    %v154 = vpop.f32.mrb[0].mxu0
    %155 = vmatprep.mubr.f32.mxu0 0.0
    %156 = vmatmul.mubr.f32.gmra.mrb[0].mxu0 %v78
    %v157 = vpop.f32.mrb[0].mxu0
    %v158 = vadd.f32 0.0, %v157
    %v159 = vpop.f32.mrb[0].mxu0
    %160 = vmatprep.mubr.f32.mxu0 0.0
    %161 = vmatmul.mubr.f32.gmra.mrb[0].mxu0 %v81
    %v162 = vpop.f32.mrb[0].mxu0
    %v163 = vadd.f32 0.0, %v162
    %v164 = vpop.f32.mrb[0].mxu0
    %165 = vmatprep.mubr.f32.mxu0 0.0
    %166 = vmatmul.mubr.f32.gmra.mrb[0].mxu0 %v84
    %v167 = vpop.f32.mrb[0].mxu0
    %v168 = vadd.f32 0.0, %v167
    %v169 = vpop.f32.mrb[0].mxu0
    %170 = vdwg.mxu0
    %s171 = scalar_lea.vmem %s5, 8
    %v172 = vld [vmem:[%s171] sm:$0xff]
    %173 = vmatprep.subr.mxu0 0.0
    %174 = vmatpush1.msra.mxu0 %v172
    %175 = vmatprep.subr.mxu0 0.0
    %176 = vmatpush1.msra.mxu0 0.0
    %177 = vmatprep.subr.mxu0 0.0
    %178 = vmatpush1.msra.mxu0 0.0
    %179 = vmatprep.subr.mxu0 0.0
    %180 = vmatpush1.msra.mxu0 0.0
    %181 = vmatprep.subr.mxu0 0.0
    %182 = vmatpush1.msra.mxu0 0.0
    %183 = vmatprep.subr.mxu0 0.0
    %184 = vmatpush1.msra.mxu0 0.0
    %185 = vmatprep.subr.mxu0 0.0
    %186 = vmatpush1.msra.mxu0 0.0
    %187 = vmatprep.subr.mxu0 0.0
    %188 = vmatpush1.msra.mxu0 0.0
    %189 = vmatprep.subr.mxu0 0.0
    %190 = vmatpush1.msra.mxu0 0.0
    %191 = vmatprep.subr.mxu0 0.0
    %192 = vmatpush1.msra.mxu0 0.0
    %193 = vmatprep.subr.mxu0 0.0
    %194 = vmatpush1.msra.mxu0 0.0
    %195 = vmatprep.subr.mxu0 0.0
    %196 = vmatpush1.msra.mxu0 0.0
    %197 = vmatprep.subr.mxu0 0.0
    %198 = vmatpush1.msra.mxu0 0.0
    %199 = vmatprep.subr.mxu0 0.0
    %200 = vmatpush1.msra.mxu0 0.0
    %201 = vmatprep.subr.mxu0 0.0
    %202 = vmatpush1.msra.mxu0 0.0
    %203 = vmatprep.subr.mxu0 0.0
    %204 = vmatpush1.msra.mxu0 0.0
    %205 = vmatprep.subr.mxu0 0.0
    %206 = vmatpush1.msra.mxu0 0.0
    %207 = vmatprep.subr.mxu0 0.0
    %208 = vmatpush1.msra.mxu0 0.0
    %209 = vmatprep.subr.mxu0 0.0
    %210 = vmatpush1.msra.mxu0 0.0
    %211 = vmatprep.subr.mxu0 0.0
    %212 = vmatpush1.msra.mxu0 0.0
    %213 = vmatprep.subr.mxu0 0.0
    %214 = vmatpush1.msra.mxu0 0.0
    %215 = vmatprep.subr.mxu0 0.0
    %216 = vmatpush1.msra.mxu0 0.0
    %217 = vmatprep.subr.mxu0 0.0
    %218 = vmatpush1.msra.mxu0 0.0
    %219 = vmatprep.subr.mxu0 0.0
    %220 = vmatpush1.msra.mxu0 0.0
    %221 = vmatprep.subr.mxu0 0.0
    %222 = vmatpush1.msra.mxu0 0.0
    %223 = vmatprep.subr.mxu0 0.0
    %224 = vmatpush1.msra.mxu0 0.0
    %225 = vmatprep.subr.mxu0 0.0
    %226 = vmatpush1.msra.mxu0 0.0
    %227 = vmatprep.subr.mxu0 0.0
    %228 = vmatpush1.msra.mxu0 0.0
    %229 = vmatprep.subr.mxu0 0.0
    %230 = vmatpush1.msra.mxu0 0.0
    %231 = vmatprep.subr.mxu0 0.0
    %232 = vmatpush1.msra.mxu0 0.0
    %233 = vmatprep.subr.mxu0 0.0
    %234 = vmatpush1.msra.mxu0 0.0
    %235 = vmatprep.subr.mxu0 0.0
    %236 = vmatpush1.msra.mxu0 0.0
    %237 = vmatprep.mubr.f32.mxu0 0.0
    %238 = vmatmul.mubr.f32.gmra.mrb[0].mxu0 %v75
    %v239 = vpop.f32.mrb[0].mxu0
    %v240 = vadd.f32 0.0, %v239
    %v241 = vpop.f32.mrb[0].mxu0
    %242 = vmatprep.mubr.f32.mxu0 0.0
    %243 = vmatmul.mubr.f32.gmra.mrb[0].mxu0 %v78
    %v244 = vpop.f32.mrb[0].mxu0
    %v245 = vadd.f32 0.0, %v244
    %v246 = vpop.f32.mrb[0].mxu0
    %247 = vmatprep.mubr.f32.mxu0 0.0
    %248 = vmatmul.mubr.f32.gmra.mrb[0].mxu0 %v81
    %v249 = vpop.f32.mrb[0].mxu0
    %v250 = vadd.f32 0.0, %v249
    %v251 = vpop.f32.mrb[0].mxu0
    %252 = vmatprep.mubr.f32.mxu0 0.0
    %253 = vmatmul.mubr.f32.gmra.mrb[0].mxu0 %v84
    %v254 = vpop.f32.mrb[0].mxu0
    %v255 = vadd.f32 0.0, %v254
    %v256 = vpop.f32.mrb[0].mxu0
    %257 = vdwg.mxu0
    %s258 = scalar_lea.vmem %s5, 16
    %v259 = vld [vmem:[%s258] sm:$0xff]
    %260 = vmatprep.subr.mxu0 0.0
    %261 = vmatpush1.msra.mxu0 %v259
    %262 = vmatprep.subr.mxu0 0.0
    %263 = vmatpush1.msra.mxu0 0.0
    %264 = vmatprep.subr.mxu0 0.0
    %265 = vmatpush1.msra.mxu0 0.0
    %266 = vmatprep.subr.mxu0 0.0
    %267 = vmatpush1.msra.mxu0 0.0
    %268 = vmatprep.subr.mxu0 0.0
    %269 = vmatpush1.msra.mxu0 0.0
    %270 = vmatprep.subr.mxu0 0.0
    %271 = vmatpush1.msra.mxu0 0.0
    %272 = vmatprep.subr.mxu0 0.0
    %273 = vmatpush1.msra.mxu0 0.0
    %274 = vmatprep.subr.mxu0 0.0
    %275 = vmatpush1.msra.mxu0 0.0
    %276 = vmatprep.subr.mxu0 0.0
    %277 = vmatpush1.msra.mxu0 0.0
    %278 = vmatprep.subr.mxu0 0.0
    %279 = vmatpush1.msra.mxu0 0.0
    %280 = vmatprep.subr.mxu0 0.0
    %281 = vmatpush1.msra.mxu0 0.0
    %282 = vmatprep.subr.mxu0 0.0
    %283 = vmatpush1.msra.mxu0 0.0
    %284 = vmatprep.subr.mxu0 0.0
    %285 = vmatpush1.msra.mxu0 0.0
    %286 = vmatprep.subr.mxu0 0.0
    %287 = vmatpush1.msra.mxu0 0.0
    %288 = vmatprep.subr.mxu0 0.0
    %289 = vmatpush1.msra.mxu0 0.0
    %290 = vmatprep.subr.mxu0 0.0
    %291 = vmatpush1.msra.mxu0 0.0
    %292 = vmatprep.subr.mxu0 0.0
    %293 = vmatpush1.msra.mxu0 0.0
    %294 = vmatprep.subr.mxu0 0.0
    %295 = vmatpush1.msra.mxu0 0.0
    %296 = vmatprep.subr.mxu0 0.0
    %297 = vmatpush1.msra.mxu0 0.0
    %298 = vmatprep.subr.mxu0 0.0
    %299 = vmatpush1.msra.mxu0 0.0
    %300 = vmatprep.subr.mxu0 0.0
    %301 = vmatpush1.msra.mxu0 0.0
    %302 = vmatprep.subr.mxu0 0.0
    %303 = vmatpush1.msra.mxu0 0.0
    %304 = vmatprep.subr.mxu0 0.0
    %305 = vmatpush1.msra.mxu0 0.0
    %306 = vmatprep.subr.mxu0 0.0
    %307 = vmatpush1.msra.mxu0 0.0
    %308 = vmatprep.subr.mxu0 0.0
    %309 = vmatpush1.msra.mxu0 0.0
    %310 = vmatprep.subr.mxu0 0.0
    %311 = vmatpush1.msra.mxu0 0.0
    %312 = vmatprep.subr.mxu0 0.0
    %313 = vmatpush1.msra.mxu0 0.0
    %314 = vmatprep.subr.mxu0 0.0
    %315 = vmatpush1.msra.mxu0 0.0
    %316 = vmatprep.subr.mxu0 0.0
    %317 = vmatpush1.msra.mxu0 0.0
    %318 = vmatprep.subr.mxu0 0.0
    %319 = vmatpush1.msra.mxu0 0.0
    %320 = vmatprep.subr.mxu0 0.0
    %321 = vmatpush1.msra.mxu0 0.0
    %322 = vmatprep.subr.mxu0 0.0
    %323 = vmatpush1.msra.mxu0 0.0
    %324 = vmatprep.mubr.f32.mxu0 0.0
    %325 = vmatmul.mubr.f32.gmra.mrb[0].mxu0 %v75
    %v326 = vpop.f32.mrb[0].mxu0
    %v327 = vadd.f32 0.0, %v326
    %v328 = vpop.f32.mrb[0].mxu0
    %329 = vmatprep.mubr.f32.mxu0 0.0
    %330 = vmatmul.mubr.f32.gmra.mrb[0].mxu0 %v78
    %v331 = vpop.f32.mrb[0].mxu0
    %v332 = vadd.f32 0.0, %v331
    %v333 = vpop.f32.mrb[0].mxu0
    %334 = vmatprep.mubr.f32.mxu0 0.0
    %335 = vmatmul.mubr.f32.gmra.mrb[0].mxu0 %v81
    %v336 = vpop.f32.mrb[0].mxu0
    %v337 = vadd.f32 0.0, %v336
    %v338 = vpop.f32.mrb[0].mxu0
    %339 = vmatprep.mubr.f32.mxu0 0.0
    %340 = vmatmul.mubr.f32.gmra.mrb[0].mxu0 %v84
    %v341 = vpop.f32.mrb[0].mxu0
    %v342 = vadd.f32 0.0, %v341
    %v343 = vpop.f32.mrb[0].mxu0
    %344 = vdwg.mxu0
    %vm345 = vcmask 261120
    %v347 = vsel %vm345, %v64, 0
    %v350 = vsel %vm345, %v65, 0
    %v353 = vsel %vm345, %v66, 0
    %v356 = vsel %vm345, %v67, 0
    %358 = vmatprep.subr.mxu0 0.0
    %359 = vmatpush1.msra.mxu0 %v153
    %360 = vmatprep.subr.mxu0 0.0
    %361 = vmatpush1.msra.mxu0 %v158
    %362 = vmatprep.subr.mxu0 0.0
    %363 = vmatpush1.msra.mxu0 %v163
    %364 = vmatprep.subr.mxu0 0.0
    %365 = vmatpush1.msra.mxu0 %v168
    %366 = vmatprep.subr.mxu0 0.0
    %367 = vmatpush1.msra.mxu0 0.0
    %368 = vmatprep.subr.mxu0 0.0
    %369 = vmatpush1.msra.mxu0 0.0
    %370 = vmatprep.subr.mxu0 0.0
    %371 = vmatpush1.msra.mxu0 0.0
    %372 = vmatprep.subr.mxu0 0.0
    %373 = vmatpush1.msra.mxu0 0.0
    %374 = vmatprep.subr.mxu0 0.0
    %375 = vmatpush1.msra.mxu0 0.0
    %376 = vmatprep.subr.mxu0 0.0
    %377 = vmatpush1.msra.mxu0 0.0
    %378 = vmatprep.subr.mxu0 0.0
    %379 = vmatpush1.msra.mxu0 0.0
    %380 = vmatprep.subr.mxu0 0.0
    %381 = vmatpush1.msra.mxu0 0.0
    %382 = vmatprep.subr.mxu0 0.0
    %383 = vmatpush1.msra.mxu0 0.0
    %384 = vmatprep.subr.mxu0 0.0
    %385 = vmatpush1.msra.mxu0 0.0
    %386 = vmatprep.subr.mxu0 0.0
    %387 = vmatpush1.msra.mxu0 0.0
    %388 = vmatprep.subr.mxu0 0.0
    %389 = vmatpush1.msra.mxu0 0.0
    %390 = vmatprep.subr.mxu0 0.0
    %391 = vmatpush1.msra.mxu0 0.0
    %392 = vmatprep.subr.mxu0 0.0
    %393 = vmatpush1.msra.mxu0 0.0
    %394 = vmatprep.subr.mxu0 0.0
    %395 = vmatpush1.msra.mxu0 0.0
    %396 = vmatprep.subr.mxu0 0.0
    %397 = vmatpush1.msra.mxu0 0.0
    %398 = vmatprep.subr.mxu0 0.0
    %399 = vmatpush1.msra.mxu0 0.0
    %400 = vmatprep.subr.mxu0 0.0
    %401 = vmatpush1.msra.mxu0 0.0
    %402 = vmatprep.subr.mxu0 0.0
    %403 = vmatpush1.msra.mxu0 0.0
    %404 = vmatprep.subr.mxu0 0.0
    %405 = vmatpush1.msra.mxu0 0.0
    %406 = vmatprep.subr.mxu0 0.0
    %407 = vmatpush1.msra.mxu0 0.0
    %408 = vmatprep.subr.mxu0 0.0
    %409 = vmatpush1.msra.mxu0 0.0
    %410 = vmatprep.subr.mxu0 0.0
    %411 = vmatpush1.msra.mxu0 0.0
    %412 = vmatprep.subr.mxu0 0.0
    %413 = vmatpush1.msra.mxu0 0.0
    %414 = vmatprep.subr.mxu0 0.0
    %415 = vmatpush1.msra.mxu0 0.0
    %416 = vmatprep.subr.mxu0 0.0
    %417 = vmatpush1.msra.mxu0 0.0
    %418 = vmatprep.subr.mxu0 0.0
    %419 = vmatpush1.msra.mxu0 0.0
    %420 = vmatprep.subr.mxu0 0.0
    %421 = vmatpush1.msra.mxu0 0.0
    %422 = vmatprep.mubr.f32.mxu0 0.0
    %423 = vmatmul.mubr.f32.gmra.mrb[0].mxu0 %v347
    %v424 = vpop.f32.mrb[0].mxu0
    %v425 = vadd.f32 0.0, %v424
    %v426 = vpop.f32.mrb[0].mxu0
    %427 = vmatprep.mubr.f32.mxu0 0.0
    %428 = vmatmul.mubr.f32.gmra.mrb[0].mxu0 %v350
    %v429 = vpop.f32.mrb[0].mxu0
    %v430 = vadd.f32 0.0, %v429
    %v431 = vpop.f32.mrb[0].mxu0
    %432 = vmatprep.mubr.f32.mxu0 0.0
    %433 = vmatmul.mubr.f32.gmra.mrb[0].mxu0 %v353
    %v434 = vpop.f32.mrb[0].mxu0
    %v435 = vadd.f32 0.0, %v434
    %v436 = vpop.f32.mrb[0].mxu0
    %437 = vmatprep.mubr.f32.mxu0 0.0
    %438 = vmatmul.mubr.f32.gmra.mrb[0].mxu0 %v356
    %v439 = vpop.f32.mrb[0].mxu0
    %v440 = vadd.f32 0.0, %v439
    %v441 = vpop.f32.mrb[0].mxu0
    %442 = vdwg.mxu0
    %v443 = vmul.f32 %v425, %v240
    %v444 = vmul.f32 %v430, %v245
    %v445 = vmul.f32 %v435, %v250
    %v446 = vmul.f32 %v440, %v255
    %v447 = vadd.f32 %v443, %v327
    %v448 = vadd.f32 %v444, %v332
    %v449 = vadd.f32 %v445, %v337
    %v450 = vadd.f32 %v446, %v342
    %vm451 = vcmask 130048
    %v452 = vsel %vm451, %v447, 0.0
    %453 = vadd.xlane.f32.xlu0 %v452
    %v454 = vpop.xlane.xlu0 %453
    %v455 = vsel %vm451, %v448, 0.0
    %456 = vadd.xlane.f32.xlu0 %v455
    %v457 = vpop.xlane.xlu0 %456
    %v458 = vsel %vm451, %v449, 0.0
    %459 = vadd.xlane.f32.xlu0 %v458
    %v460 = vpop.xlane.xlu0 %459
    %v461 = vsel %vm451, %v450, 0.0
    %462 = vadd.xlane.f32.xlu0 %v461
    %v463 = vpop.xlane.xlu0 %462
    %v464 = vrcp.pop 16.0
    %v465 = vmul.f32 %v454, %v464
    %v466 = vmul.f32 %v457, %v464
    %v467 = vmul.f32 %v460, %v464
    %v468 = vmul.f32 %v463, %v464
    %v469 = vsub.f32 %v447, %v465
    %v470 = vsub.f32 %v448, %v466
    %v471 = vsub.f32 %v449, %v467
    %v472 = vsub.f32 %v450, %v468
    %v473 = vmul.f32 %v469, %v469
    %v474 = vmul.f32 %v470, %v470
    %v475 = vmul.f32 %v471, %v471
    %v476 = vmul.f32 %v472, %v472
    %v477 = vsel %vm451, %v473, 0.0
    %478 = vadd.xlane.f32.xlu0 %v477
    %v479 = vpop.xlane.xlu0 %478
    %v480 = vsel %vm451, %v474, 0.0
    %481 = vadd.xlane.f32.xlu0 %v480
    %v482 = vpop.xlane.xlu0 %481
    %v483 = vsel %vm451, %v475, 0.0
    %484 = vadd.xlane.f32.xlu0 %v483
    %v485 = vpop.xlane.xlu0 %484
    %v486 = vsel %vm451, %v476, 0.0
    %487 = vadd.xlane.f32.xlu0 %v486
    %v488 = vpop.xlane.xlu0 %487
    %v489 = vrsqrt.pop %v479
    %v490 = vmul.f32 %v479, %v489
    %vm491 = vcmp.eq.f32.partialorder %v479, inf
    %v492 = vsel %vm491, %v479, %v490
    %vm493 = vcmp.eq.f32.partialorder %v479, 0.0
    %v494 = vand.u32 %v479, 2147483648
    %v495 = vsel %vm493, %v494, %v492
    %v496 = vrsqrt.pop %v482
    %v497 = vmul.f32 %v482, %v496
    %vm498 = vcmp.eq.f32.partialorder %v482, inf
    %v499 = vsel %vm498, %v482, %v497
    %vm500 = vcmp.eq.f32.partialorder %v482, 0.0
    %v501 = vand.u32 %v482, 2147483648
    %v502 = vsel %vm500, %v501, %v499
    %v503 = vrsqrt.pop %v485
    %v504 = vmul.f32 %v485, %v503
    %vm505 = vcmp.eq.f32.partialorder %v485, inf
    %v506 = vsel %vm505, %v485, %v504
    %vm507 = vcmp.eq.f32.partialorder %v485, 0.0
    %v508 = vand.u32 %v485, 2147483648
    %v509 = vsel %vm507, %v508, %v506
    %v510 = vrsqrt.pop %v488
    %v511 = vmul.f32 %v488, %v510
    %vm512 = vcmp.eq.f32.partialorder %v488, inf
    %v513 = vsel %vm512, %v488, %v511
    %vm514 = vcmp.eq.f32.partialorder %v488, 0.0
    %v515 = vand.u32 %v488, 2147483648
    %v516 = vsel %vm514, %v515, %v513
    %v517 = vmul.f32 %v495, 0.25
    %v518 = vmul.f32 %v502, 0.25
    %v519 = vmul.f32 %v509, 0.25
    %v520 = vmul.f32 %v516, 0.25
    %v521 = vadd.f32 %v517, 1e-05
    %v522 = vadd.f32 %v518, 1e-05
    %v523 = vadd.f32 %v519, 1e-05
    %v524 = vadd.f32 %v520, 1e-05
    %v525 = vrcp.pop %v521
    %v526 = vrcp.pop %v522
    %v527 = vrcp.pop %v523
    %v528 = vrcp.pop %v524
    %v529 = vmul.f32 %v469, %v525
    %v530 = vmul.f32 %v470, %v526
    %v531 = vmul.f32 %v471, %v527
    %v532 = vmul.f32 %v472, %v528
    %vm533 = vcmp.ge.f32.partialorder %v529, 0.0
    %vm534 = vcmp.ge.f32.partialorder %v530, 0.0
    %vm535 = vcmp.ge.f32.partialorder %v531, 0.0
    %vm536 = vcmp.ge.f32.partialorder %v532, 0.0
    %v537 = vmul.f32 %v529, 0.02
    %v538 = vmul.f32 %v530, 0.02
    %v539 = vmul.f32 %v531, 0.02
    %v540 = vmul.f32 %v532, 0.02
    %v541 = vsel %vm533, %v529, %v537
    %v542 = vsel %vm534, %v530, %v538
    %v543 = vsel %vm535, %v531, %v539
    %v544 = vsel %vm536, %v532, %v540
    %v545 = vld [vmem:[%s4] sm:$0xff]
    %v546 = vld [vmem:[%s4 + $0x8] sm:$0xff]
    %v547 = vld [vmem:[%s4 + $0x10] sm:$0xff]
    %v548 = vld [vmem:[%s4 + $0x18] sm:$0xff]
    %v550 = vsel %vm345, %v545, 0
    %v553 = vsel %vm345, %v546, 0
    %v556 = vsel %vm345, %v547, 0
    %v559 = vsel %vm345, %v548, 0
    %561 = vmatprep.subr.mxu0 0.0
    %562 = vmatpush1.msra.mxu0 %v541
    %563 = vmatprep.subr.mxu0 0.0
    %564 = vmatpush1.msra.mxu0 %v542
    %565 = vmatprep.subr.mxu0 0.0
    %566 = vmatpush1.msra.mxu0 %v543
    %567 = vmatprep.subr.mxu0 0.0
    %568 = vmatpush1.msra.mxu0 %v544
    %569 = vmatprep.subr.mxu0 0.0
    %570 = vmatpush1.msra.mxu0 0.0
    %571 = vmatprep.subr.mxu0 0.0
    %572 = vmatpush1.msra.mxu0 0.0
    %573 = vmatprep.subr.mxu0 0.0
    %574 = vmatpush1.msra.mxu0 0.0
    %575 = vmatprep.subr.mxu0 0.0
    %576 = vmatpush1.msra.mxu0 0.0
    %577 = vmatprep.subr.mxu0 0.0
    %578 = vmatpush1.msra.mxu0 0.0
    %579 = vmatprep.subr.mxu0 0.0
    %580 = vmatpush1.msra.mxu0 0.0
    %581 = vmatprep.subr.mxu0 0.0
    %582 = vmatpush1.msra.mxu0 0.0
    %583 = vmatprep.subr.mxu0 0.0
    %584 = vmatpush1.msra.mxu0 0.0
    %585 = vmatprep.subr.mxu0 0.0
    %586 = vmatpush1.msra.mxu0 0.0
    %587 = vmatprep.subr.mxu0 0.0
    %588 = vmatpush1.msra.mxu0 0.0
    %589 = vmatprep.subr.mxu0 0.0
    %590 = vmatpush1.msra.mxu0 0.0
    %591 = vmatprep.subr.mxu0 0.0
    %592 = vmatpush1.msra.mxu0 0.0
    %593 = vmatprep.subr.mxu0 0.0
    %594 = vmatpush1.msra.mxu0 0.0
    %595 = vmatprep.subr.mxu0 0.0
    %596 = vmatpush1.msra.mxu0 0.0
    %597 = vmatprep.subr.mxu0 0.0
    %598 = vmatpush1.msra.mxu0 0.0
    %599 = vmatprep.subr.mxu0 0.0
    %600 = vmatpush1.msra.mxu0 0.0
    %601 = vmatprep.subr.mxu0 0.0
    %602 = vmatpush1.msra.mxu0 0.0
    %603 = vmatprep.subr.mxu0 0.0
    %604 = vmatpush1.msra.mxu0 0.0
    %605 = vmatprep.subr.mxu0 0.0
    %606 = vmatpush1.msra.mxu0 0.0
    %607 = vmatprep.subr.mxu0 0.0
    %608 = vmatpush1.msra.mxu0 0.0
    %609 = vmatprep.subr.mxu0 0.0
    %610 = vmatpush1.msra.mxu0 0.0
    %611 = vmatprep.subr.mxu0 0.0
    %612 = vmatpush1.msra.mxu0 0.0
    %613 = vmatprep.subr.mxu0 0.0
    %614 = vmatpush1.msra.mxu0 0.0
    %615 = vmatprep.subr.mxu0 0.0
    %616 = vmatpush1.msra.mxu0 0.0
    %617 = vmatprep.subr.mxu0 0.0
    %618 = vmatpush1.msra.mxu0 0.0
    %619 = vmatprep.subr.mxu0 0.0
    %620 = vmatpush1.msra.mxu0 0.0
    %621 = vmatprep.subr.mxu0 0.0
    %622 = vmatpush1.msra.mxu0 0.0
    %623 = vmatprep.subr.mxu0 0.0
    %624 = vmatpush1.msra.mxu0 0.0
    %625 = vmatprep.mubr.f32.mxu0 0.0
    %626 = vmatmul.mubr.f32.gmra.mrb[0].mxu0 %v550
    %v627 = vpop.f32.mrb[0].mxu0
    %v628 = vadd.f32 0.0, %v627
    %v629 = vpop.f32.mrb[0].mxu0
    %630 = vmatprep.mubr.f32.mxu0 0.0
    %631 = vmatmul.mubr.f32.gmra.mrb[0].mxu0 %v553
    %v632 = vpop.f32.mrb[0].mxu0
    %v633 = vadd.f32 0.0, %v632
    %v634 = vpop.f32.mrb[0].mxu0
    %635 = vmatprep.mubr.f32.mxu0 0.0
    %636 = vmatmul.mubr.f32.gmra.mrb[0].mxu0 %v556
    %v637 = vpop.f32.mrb[0].mxu0
    %v638 = vadd.f32 0.0, %v637
    %v639 = vpop.f32.mrb[0].mxu0
    %640 = vmatprep.mubr.f32.mxu0 0.0
    %641 = vmatmul.mubr.f32.gmra.mrb[0].mxu0 %v559
    %v642 = vpop.f32.mrb[0].mxu0
    %v643 = vadd.f32 0.0, %v642
    %v644 = vpop.f32.mrb[0].mxu0
    %645 = vdwg.mxu0
    %s646 = scalar_lea.vmem %s4, 32
    %v647 = vld [vmem:[%s646] sm:$0xff]
    %v648 = vld [vmem:[%s646 + $0x8] sm:$0xff]
    %v649 = vld [vmem:[%s646 + $0x10] sm:$0xff]
    %v650 = vld [vmem:[%s646 + $0x18] sm:$0xff]
    %v652 = vsel %vm345, %v647, 0
    %v655 = vsel %vm345, %v648, 0
    %v658 = vsel %vm345, %v649, 0
    %v661 = vsel %vm345, %v650, 0
    %663 = vmatprep.subr.mxu0 0.0
    %664 = vmatpush1.msra.mxu0 %v541
    %665 = vmatprep.subr.mxu0 0.0
    %666 = vmatpush1.msra.mxu0 %v542
    %667 = vmatprep.subr.mxu0 0.0
    %668 = vmatpush1.msra.mxu0 %v543
    %669 = vmatprep.subr.mxu0 0.0
    %670 = vmatpush1.msra.mxu0 %v544
    %671 = vmatprep.subr.mxu0 0.0
    %672 = vmatpush1.msra.mxu0 0.0
    %673 = vmatprep.subr.mxu0 0.0
    %674 = vmatpush1.msra.mxu0 0.0
    %675 = vmatprep.subr.mxu0 0.0
    %676 = vmatpush1.msra.mxu0 0.0
    %677 = vmatprep.subr.mxu0 0.0
    %678 = vmatpush1.msra.mxu0 0.0
    %679 = vmatprep.subr.mxu0 0.0
    %680 = vmatpush1.msra.mxu0 0.0
    %681 = vmatprep.subr.mxu0 0.0
    %682 = vmatpush1.msra.mxu0 0.0
    %683 = vmatprep.subr.mxu0 0.0
    %684 = vmatpush1.msra.mxu0 0.0
    %685 = vmatprep.subr.mxu0 0.0
    %686 = vmatpush1.msra.mxu0 0.0
    %687 = vmatprep.subr.mxu0 0.0
    %688 = vmatpush1.msra.mxu0 0.0
    %689 = vmatprep.subr.mxu0 0.0
    %690 = vmatpush1.msra.mxu0 0.0
    %691 = vmatprep.subr.mxu0 0.0
    %692 = vmatpush1.msra.mxu0 0.0
    %693 = vmatprep.subr.mxu0 0.0
    %694 = vmatpush1.msra.mxu0 0.0
    %695 = vmatprep.subr.mxu0 0.0
    %696 = vmatpush1.msra.mxu0 0.0
    %697 = vmatprep.subr.mxu0 0.0
    %698 = vmatpush1.msra.mxu0 0.0
    %699 = vmatprep.subr.mxu0 0.0
    %700 = vmatpush1.msra.mxu0 0.0
    %701 = vmatprep.subr.mxu0 0.0
    %702 = vmatpush1.msra.mxu0 0.0
    %703 = vmatprep.subr.mxu0 0.0
    %704 = vmatpush1.msra.mxu0 0.0
    %705 = vmatprep.subr.mxu0 0.0
    %706 = vmatpush1.msra.mxu0 0.0
    %707 = vmatprep.subr.mxu0 0.0
    %708 = vmatpush1.msra.mxu0 0.0
    %709 = vmatprep.subr.mxu0 0.0
    %710 = vmatpush1.msra.mxu0 0.0
    %711 = vmatprep.subr.mxu0 0.0
    %712 = vmatpush1.msra.mxu0 0.0
    %713 = vmatprep.subr.mxu0 0.0
    %714 = vmatpush1.msra.mxu0 0.0
    %715 = vmatprep.subr.mxu0 0.0
    %716 = vmatpush1.msra.mxu0 0.0
    %717 = vmatprep.subr.mxu0 0.0
    %718 = vmatpush1.msra.mxu0 0.0
    %719 = vmatprep.subr.mxu0 0.0
    %720 = vmatpush1.msra.mxu0 0.0
    %721 = vmatprep.subr.mxu0 0.0
    %722 = vmatpush1.msra.mxu0 0.0
    %723 = vmatprep.subr.mxu0 0.0
    %724 = vmatpush1.msra.mxu0 0.0
    %725 = vmatprep.subr.mxu0 0.0
    %726 = vmatpush1.msra.mxu0 0.0
    %727 = vmatprep.mubr.f32.mxu0 0.0
    %728 = vmatmul.mubr.f32.gmra.mrb[0].mxu0 %v652
    %v729 = vpop.f32.mrb[0].mxu0
    %v730 = vadd.f32 0.0, %v729
    %v731 = vpop.f32.mrb[0].mxu0
    %732 = vmatprep.mubr.f32.mxu0 0.0
    %733 = vmatmul.mubr.f32.gmra.mrb[0].mxu0 %v655
    %v734 = vpop.f32.mrb[0].mxu0
    %v735 = vadd.f32 0.0, %v734
    %v736 = vpop.f32.mrb[0].mxu0
    %737 = vmatprep.mubr.f32.mxu0 0.0
    %738 = vmatmul.mubr.f32.gmra.mrb[0].mxu0 %v658
    %v739 = vpop.f32.mrb[0].mxu0
    %v740 = vadd.f32 0.0, %v739
    %v741 = vpop.f32.mrb[0].mxu0
    %742 = vmatprep.mubr.f32.mxu0 0.0
    %743 = vmatmul.mubr.f32.gmra.mrb[0].mxu0 %v661
    %v744 = vpop.f32.mrb[0].mxu0
    %v745 = vadd.f32 0.0, %v744
    %v746 = vpop.f32.mrb[0].mxu0
    %747 = vdwg.mxu0
    %752 = vrot.lane.b32.xlu0 %v628, 16
    %v753 = vpop.permute.xlu0 %752
    %754 = vrot.lane.b32.xlu0 %v633, 16
    %v755 = vpop.permute.xlu0 %754
    %756 = vrot.lane.b32.xlu0 %v638, 16
    %v757 = vpop.permute.xlu0 %756
    %758 = vrot.lane.b32.xlu0 %v643, 16
    %v759 = vpop.permute.xlu0 %758
    %768 = vrot.lane.b32.xlu0 %v730, 32
    %v769 = vpop.permute.xlu0 %768
    %770 = vrot.lane.b32.xlu0 %v735, 32
    %v771 = vpop.permute.xlu0 %770
    %772 = vrot.lane.b32.xlu0 %v740, 32
    %v773 = vpop.permute.xlu0 %772
    %774 = vrot.lane.b32.xlu0 %v745, 32
    %v775 = vpop.permute.xlu0 %774
    %v780 = vsel %vm451, %v541, %v753
    %v781 = vsel %vm451, %v542, %v755
    %v782 = vsel %vm451, %v543, %v757
    %v783 = vsel %vm451, %v544, %v759
    %v784 = vsel %vm345, %v780, %v769
    %v785 = vsel %vm345, %v781, %v771
    %v786 = vsel %vm345, %v782, %v773
    %v787 = vsel %vm345, %v783, %v775
    %v788 = vld [vmem:[%s6] sm:$0xff]
    %v789 = vld [vmem:[%s6 + $0x8] sm:$0xff]
    %v790 = vld [vmem:[%s6 + $0x10] sm:$0xff]
    %v791 = vld [vmem:[%s6 + $0x18] sm:$0xff]
    %v792 = vld [vmem:[%s6 + $0x20] sm:$0xff]
    %v793 = vld [vmem:[%s6 + $0x28] sm:$0xff]
    %vm794 = vcmask 392192
    %v796 = vsel %vm794, %v784, 0
    %v799 = vsel %vm794, %v785, 0
    %v802 = vsel %vm794, %v786, 0
    %v805 = vsel %vm794, %v787, 0
    %807 = vmatprep.subr.mxu0 0.0
    %808 = vmatpush1.msra.mxu0 %v788
    %809 = vmatprep.subr.mxu0 0.0
    %810 = vmatpush1.msra.mxu0 %v789
    %811 = vmatprep.subr.mxu0 0.0
    %812 = vmatpush1.msra.mxu0 %v790
    %813 = vmatprep.subr.mxu0 0.0
    %814 = vmatpush1.msra.mxu0 %v791
    %815 = vmatprep.subr.mxu0 0.0
    %816 = vmatpush1.msra.mxu0 %v792
    %817 = vmatprep.subr.mxu0 0.0
    %818 = vmatpush1.msra.mxu0 %v793
    %819 = vmatprep.subr.mxu0 0.0
    %820 = vmatpush1.msra.mxu0 0.0
    %821 = vmatprep.subr.mxu0 0.0
    %822 = vmatpush1.msra.mxu0 0.0
    %823 = vmatprep.subr.mxu0 0.0
    %824 = vmatpush1.msra.mxu0 0.0
    %825 = vmatprep.subr.mxu0 0.0
    %826 = vmatpush1.msra.mxu0 0.0
    %827 = vmatprep.subr.mxu0 0.0
    %828 = vmatpush1.msra.mxu0 0.0
    %829 = vmatprep.subr.mxu0 0.0
    %830 = vmatpush1.msra.mxu0 0.0
    %831 = vmatprep.subr.mxu0 0.0
    %832 = vmatpush1.msra.mxu0 0.0
    %833 = vmatprep.subr.mxu0 0.0
    %834 = vmatpush1.msra.mxu0 0.0
    %835 = vmatprep.subr.mxu0 0.0
    %836 = vmatpush1.msra.mxu0 0.0
    %837 = vmatprep.subr.mxu0 0.0
    %838 = vmatpush1.msra.mxu0 0.0
    %839 = vmatprep.subr.mxu0 0.0
    %840 = vmatpush1.msra.mxu0 0.0
    %841 = vmatprep.subr.mxu0 0.0
    %842 = vmatpush1.msra.mxu0 0.0
    %843 = vmatprep.subr.mxu0 0.0
    %844 = vmatpush1.msra.mxu0 0.0
    %845 = vmatprep.subr.mxu0 0.0
    %846 = vmatpush1.msra.mxu0 0.0
    %847 = vmatprep.subr.mxu0 0.0
    %848 = vmatpush1.msra.mxu0 0.0
    %849 = vmatprep.subr.mxu0 0.0
    %850 = vmatpush1.msra.mxu0 0.0
    %851 = vmatprep.subr.mxu0 0.0
    %852 = vmatpush1.msra.mxu0 0.0
    %853 = vmatprep.subr.mxu0 0.0
    %854 = vmatpush1.msra.mxu0 0.0
    %855 = vmatprep.subr.mxu0 0.0
    %856 = vmatpush1.msra.mxu0 0.0
    %857 = vmatprep.subr.mxu0 0.0
    %858 = vmatpush1.msra.mxu0 0.0
    %859 = vmatprep.subr.mxu0 0.0
    %860 = vmatpush1.msra.mxu0 0.0
    %861 = vmatprep.subr.mxu0 0.0
    %862 = vmatpush1.msra.mxu0 0.0
    %863 = vmatprep.subr.mxu0 0.0
    %864 = vmatpush1.msra.mxu0 0.0
    %865 = vmatprep.subr.mxu0 0.0
    %866 = vmatpush1.msra.mxu0 0.0
    %867 = vmatprep.subr.mxu0 0.0
    %868 = vmatpush1.msra.mxu0 0.0
    %869 = vmatprep.subr.mxu0 0.0
    %870 = vmatpush1.msra.mxu0 0.0
    %871 = vmatprep.mubr.f32.mxu0 0.0
    %872 = vmatmul.mubr.f32.gmra.mrb[0].mxu0 %v796
    %v873 = vpop.f32.mrb[0].mxu0
    %v874 = vadd.f32 0.0, %v873
    %v875 = vpop.f32.mrb[0].mxu0
    %876 = vmatprep.mubr.f32.mxu0 0.0
    %877 = vmatmul.mubr.f32.gmra.mrb[0].mxu0 %v799
    %v878 = vpop.f32.mrb[0].mxu0
    %v879 = vadd.f32 0.0, %v878
    %v880 = vpop.f32.mrb[0].mxu0
    %881 = vmatprep.mubr.f32.mxu0 0.0
    %882 = vmatmul.mubr.f32.gmra.mrb[0].mxu0 %v802
    %v883 = vpop.f32.mrb[0].mxu0
    %v884 = vadd.f32 0.0, %v883
    %v885 = vpop.f32.mrb[0].mxu0
    %886 = vmatprep.mubr.f32.mxu0 0.0
    %887 = vmatmul.mubr.f32.gmra.mrb[0].mxu0 %v805
    %v888 = vpop.f32.mrb[0].mxu0
    %v889 = vadd.f32 0.0, %v888
    %v890 = vpop.f32.mrb[0].mxu0
    %891 = vdwg.mxu0
    %s892 = scalar_lea.vmem %s6, 48
    %v893 = vld [vmem:[%s892] sm:$0xff]
    %v894 = vld [vmem:[%s892 + $0x8] sm:$0xff]
    %v895 = vld [vmem:[%s892 + $0x10] sm:$0xff]
    %v896 = vld [vmem:[%s892 + $0x18] sm:$0xff]
    %v897 = vld [vmem:[%s892 + $0x20] sm:$0xff]
    %v898 = vld [vmem:[%s892 + $0x28] sm:$0xff]
    %899 = vmatprep.subr.mxu0 0.0
    %900 = vmatpush1.msra.mxu0 %v893
    %901 = vmatprep.subr.mxu0 0.0
    %902 = vmatpush1.msra.mxu0 %v894
    %903 = vmatprep.subr.mxu0 0.0
    %904 = vmatpush1.msra.mxu0 %v895
    %905 = vmatprep.subr.mxu0 0.0
    %906 = vmatpush1.msra.mxu0 %v896
    %907 = vmatprep.subr.mxu0 0.0
    %908 = vmatpush1.msra.mxu0 %v897
    %909 = vmatprep.subr.mxu0 0.0
    %910 = vmatpush1.msra.mxu0 %v898
    %911 = vmatprep.subr.mxu0 0.0
    %912 = vmatpush1.msra.mxu0 0.0
    %913 = vmatprep.subr.mxu0 0.0
    %914 = vmatpush1.msra.mxu0 0.0
    %915 = vmatprep.subr.mxu0 0.0
    %916 = vmatpush1.msra.mxu0 0.0
    %917 = vmatprep.subr.mxu0 0.0
    %918 = vmatpush1.msra.mxu0 0.0
    %919 = vmatprep.subr.mxu0 0.0
    %920 = vmatpush1.msra.mxu0 0.0
    %921 = vmatprep.subr.mxu0 0.0
    %922 = vmatpush1.msra.mxu0 0.0
    %923 = vmatprep.subr.mxu0 0.0
    %924 = vmatpush1.msra.mxu0 0.0
    %925 = vmatprep.subr.mxu0 0.0
    %926 = vmatpush1.msra.mxu0 0.0
    %927 = vmatprep.subr.mxu0 0.0
    %928 = vmatpush1.msra.mxu0 0.0
    %929 = vmatprep.subr.mxu0 0.0
    %930 = vmatpush1.msra.mxu0 0.0
    %931 = vmatprep.subr.mxu0 0.0
    %932 = vmatpush1.msra.mxu0 0.0
    %933 = vmatprep.subr.mxu0 0.0
    %934 = vmatpush1.msra.mxu0 0.0
    %935 = vmatprep.subr.mxu0 0.0
    %936 = vmatpush1.msra.mxu0 0.0
    %937 = vmatprep.subr.mxu0 0.0
    %938 = vmatpush1.msra.mxu0 0.0
    %939 = vmatprep.subr.mxu0 0.0
    %940 = vmatpush1.msra.mxu0 0.0
    %941 = vmatprep.subr.mxu0 0.0
    %942 = vmatpush1.msra.mxu0 0.0
    %943 = vmatprep.subr.mxu0 0.0
    %944 = vmatpush1.msra.mxu0 0.0
    %945 = vmatprep.subr.mxu0 0.0
    %946 = vmatpush1.msra.mxu0 0.0
    %947 = vmatprep.subr.mxu0 0.0
    %948 = vmatpush1.msra.mxu0 0.0
    %949 = vmatprep.subr.mxu0 0.0
    %950 = vmatpush1.msra.mxu0 0.0
    %951 = vmatprep.subr.mxu0 0.0
    %952 = vmatpush1.msra.mxu0 0.0
    %953 = vmatprep.subr.mxu0 0.0
    %954 = vmatpush1.msra.mxu0 0.0
    %955 = vmatprep.subr.mxu0 0.0
    %956 = vmatpush1.msra.mxu0 0.0
    %957 = vmatprep.subr.mxu0 0.0
    %958 = vmatpush1.msra.mxu0 0.0
    %959 = vmatprep.subr.mxu0 0.0
    %960 = vmatpush1.msra.mxu0 0.0
    %961 = vmatprep.subr.mxu0 0.0
    %962 = vmatpush1.msra.mxu0 0.0
    %963 = vmatprep.mubr.f32.mxu0 0.0
    %964 = vmatmul.mubr.f32.gmra.mrb[0].mxu0 %v796
    %v965 = vpop.f32.mrb[0].mxu0
    %v966 = vadd.f32 0.0, %v965
    %v967 = vpop.f32.mrb[0].mxu0
    %968 = vmatprep.mubr.f32.mxu0 0.0
    %969 = vmatmul.mubr.f32.gmra.mrb[0].mxu0 %v799
    %v970 = vpop.f32.mrb[0].mxu0
    %v971 = vadd.f32 0.0, %v970
    %v972 = vpop.f32.mrb[0].mxu0
    %973 = vmatprep.mubr.f32.mxu0 0.0
    %974 = vmatmul.mubr.f32.gmra.mrb[0].mxu0 %v802
    %v975 = vpop.f32.mrb[0].mxu0
    %v976 = vadd.f32 0.0, %v975
    %v977 = vpop.f32.mrb[0].mxu0
    %978 = vmatprep.mubr.f32.mxu0 0.0
    %979 = vmatmul.mubr.f32.gmra.mrb[0].mxu0 %v805
    %v980 = vpop.f32.mrb[0].mxu0
    %v981 = vadd.f32 0.0, %v980
    %v982 = vpop.f32.mrb[0].mxu0
    %983 = vdwg.mxu0
    %s984 = scalar_lea.vmem %s6, 96
    %v985 = vld [vmem:[%s984] sm:$0xff]
    %v986 = vld [vmem:[%s984 + $0x8] sm:$0xff]
    %v987 = vld [vmem:[%s984 + $0x10] sm:$0xff]
    %v988 = vld [vmem:[%s984 + $0x18] sm:$0xff]
    %v989 = vld [vmem:[%s984 + $0x20] sm:$0xff]
    %v990 = vld [vmem:[%s984 + $0x28] sm:$0xff]
    %991 = vmatprep.subr.mxu0 0.0
    %992 = vmatpush1.msra.mxu0 %v985
    %993 = vmatprep.subr.mxu0 0.0
    %994 = vmatpush1.msra.mxu0 %v986
    %995 = vmatprep.subr.mxu0 0.0
    %996 = vmatpush1.msra.mxu0 %v987
    %997 = vmatprep.subr.mxu0 0.0
    %998 = vmatpush1.msra.mxu0 %v988
    %999 = vmatprep.subr.mxu0 0.0
    %1000 = vmatpush1.msra.mxu0 %v989
    %1001 = vmatprep.subr.mxu0 0.0
    %1002 = vmatpush1.msra.mxu0 %v990
    %1003 = vmatprep.subr.mxu0 0.0
    %1004 = vmatpush1.msra.mxu0 0.0
    %1005 = vmatprep.subr.mxu0 0.0
    %1006 = vmatpush1.msra.mxu0 0.0
    %1007 = vmatprep.subr.mxu0 0.0
    %1008 = vmatpush1.msra.mxu0 0.0
    %1009 = vmatprep.subr.mxu0 0.0
    %1010 = vmatpush1.msra.mxu0 0.0
    %1011 = vmatprep.subr.mxu0 0.0
    %1012 = vmatpush1.msra.mxu0 0.0
    %1013 = vmatprep.subr.mxu0 0.0
    %1014 = vmatpush1.msra.mxu0 0.0
    %1015 = vmatprep.subr.mxu0 0.0
    %1016 = vmatpush1.msra.mxu0 0.0
    %1017 = vmatprep.subr.mxu0 0.0
    %1018 = vmatpush1.msra.mxu0 0.0
    %1019 = vmatprep.subr.mxu0 0.0
    %1020 = vmatpush1.msra.mxu0 0.0
    %1021 = vmatprep.subr.mxu0 0.0
    %1022 = vmatpush1.msra.mxu0 0.0
    %1023 = vmatprep.subr.mxu0 0.0
    %1024 = vmatpush1.msra.mxu0 0.0
    %1025 = vmatprep.subr.mxu0 0.0
    %1026 = vmatpush1.msra.mxu0 0.0
    %1027 = vmatprep.subr.mxu0 0.0
    %1028 = vmatpush1.msra.mxu0 0.0
    %1029 = vmatprep.subr.mxu0 0.0
    %1030 = vmatpush1.msra.mxu0 0.0
    %1031 = vmatprep.subr.mxu0 0.0
    %1032 = vmatpush1.msra.mxu0 0.0
    %1033 = vmatprep.subr.mxu0 0.0
    %1034 = vmatpush1.msra.mxu0 0.0
    %1035 = vmatprep.subr.mxu0 0.0
    %1036 = vmatpush1.msra.mxu0 0.0
    %1037 = vmatprep.subr.mxu0 0.0
    %1038 = vmatpush1.msra.mxu0 0.0
    %1039 = vmatprep.subr.mxu0 0.0
    %1040 = vmatpush1.msra.mxu0 0.0
    %1041 = vmatprep.subr.mxu0 0.0
    %1042 = vmatpush1.msra.mxu0 0.0
    %1043 = vmatprep.subr.mxu0 0.0
    %1044 = vmatpush1.msra.mxu0 0.0
    %1045 = vmatprep.subr.mxu0 0.0
    %1046 = vmatpush1.msra.mxu0 0.0
    %1047 = vmatprep.subr.mxu0 0.0
    %1048 = vmatpush1.msra.mxu0 0.0
    %1049 = vmatprep.subr.mxu0 0.0
    %1050 = vmatpush1.msra.mxu0 0.0
    %1051 = vmatprep.subr.mxu0 0.0
    %1052 = vmatpush1.msra.mxu0 0.0
    %1053 = vmatprep.subr.mxu0 0.0
    %1054 = vmatpush1.msra.mxu0 0.0
    %1055 = vmatprep.mubr.f32.mxu0 0.0
    %1056 = vmatmul.mubr.f32.gmra.mrb[0].mxu0 %v796
    %v1057 = vpop.f32.mrb[0].mxu0
    %v1058 = vadd.f32 0.0, %v1057
    %v1059 = vpop.f32.mrb[0].mxu0
    %1060 = vmatprep.mubr.f32.mxu0 0.0
    %1061 = vmatmul.mubr.f32.gmra.mrb[0].mxu0 %v799
    %v1062 = vpop.f32.mrb[0].mxu0
    %v1063 = vadd.f32 0.0, %v1062
    %v1064 = vpop.f32.mrb[0].mxu0
    %1065 = vmatprep.mubr.f32.mxu0 0.0
    %1066 = vmatmul.mubr.f32.gmra.mrb[0].mxu0 %v802
    %v1067 = vpop.f32.mrb[0].mxu0
    %v1068 = vadd.f32 0.0, %v1067
    %v1069 = vpop.f32.mrb[0].mxu0
    %1070 = vmatprep.mubr.f32.mxu0 0.0
    %1071 = vmatmul.mubr.f32.gmra.mrb[0].mxu0 %v805
    %v1072 = vpop.f32.mrb[0].mxu0
    %v1073 = vadd.f32 0.0, %v1072
    %v1074 = vpop.f32.mrb[0].mxu0
    %1075 = vdwg.mxu0
    %v1076 = vmul.f32 %v874, %v966
    %v1077 = vmul.f32 %v879, %v971
    %v1078 = vmul.f32 %v884, %v976
    %v1079 = vmul.f32 %v889, %v981
    %v1080 = vadd.f32 %v1076, %v1058
    %v1081 = vadd.f32 %v1077, %v1063
    %v1082 = vadd.f32 %v1078, %v1068
    %v1083 = vadd.f32 %v1079, %v1073
    %v1084 = vsel %vm451, %v1080, 0.0
    %1085 = vadd.xlane.f32.xlu0 %v1084
    %v1086 = vpop.xlane.xlu0 %1085
    %v1087 = vsel %vm451, %v1081, 0.0
    %1088 = vadd.xlane.f32.xlu0 %v1087
    %v1089 = vpop.xlane.xlu0 %1088
    %v1090 = vsel %vm451, %v1082, 0.0
    %1091 = vadd.xlane.f32.xlu0 %v1090
    %v1092 = vpop.xlane.xlu0 %1091
    %v1093 = vsel %vm451, %v1083, 0.0
    %1094 = vadd.xlane.f32.xlu0 %v1093
    %v1095 = vpop.xlane.xlu0 %1094
    %v1096 = vmul.f32 %v1086, %v464
    %v1097 = vmul.f32 %v1089, %v464
    %v1098 = vmul.f32 %v1092, %v464
    %v1099 = vmul.f32 %v1095, %v464
    %v1100 = vsub.f32 %v1080, %v1096
    %v1101 = vsub.f32 %v1081, %v1097
    %v1102 = vsub.f32 %v1082, %v1098
    %v1103 = vsub.f32 %v1083, %v1099
    %v1104 = vmul.f32 %v1100, %v1100
    %v1105 = vmul.f32 %v1101, %v1101
    %v1106 = vmul.f32 %v1102, %v1102
    %v1107 = vmul.f32 %v1103, %v1103
    %v1108 = vsel %vm451, %v1104, 0.0
    %1109 = vadd.xlane.f32.xlu0 %v1108
    %v1110 = vpop.xlane.xlu0 %1109
    %v1111 = vsel %vm451, %v1105, 0.0
    %1112 = vadd.xlane.f32.xlu0 %v1111
    %v1113 = vpop.xlane.xlu0 %1112
    %v1114 = vsel %vm451, %v1106, 0.0
    %1115 = vadd.xlane.f32.xlu0 %v1114
    %v1116 = vpop.xlane.xlu0 %1115
    %v1117 = vsel %vm451, %v1107, 0.0
    %1118 = vadd.xlane.f32.xlu0 %v1117
    %v1119 = vpop.xlane.xlu0 %1118
    %v1120 = vrsqrt.pop %v1110
    %v1121 = vmul.f32 %v1110, %v1120
    %vm1122 = vcmp.eq.f32.partialorder %v1110, inf
    %v1123 = vsel %vm1122, %v1110, %v1121
    %vm1124 = vcmp.eq.f32.partialorder %v1110, 0.0
    %v1125 = vand.u32 %v1110, 2147483648
    %v1126 = vsel %vm1124, %v1125, %v1123
    %v1127 = vrsqrt.pop %v1113
    %v1128 = vmul.f32 %v1113, %v1127
    %vm1129 = vcmp.eq.f32.partialorder %v1113, inf
    %v1130 = vsel %vm1129, %v1113, %v1128
    %vm1131 = vcmp.eq.f32.partialorder %v1113, 0.0
    %v1132 = vand.u32 %v1113, 2147483648
    %v1133 = vsel %vm1131, %v1132, %v1130
    %v1134 = vrsqrt.pop %v1116
    %v1135 = vmul.f32 %v1116, %v1134
    %vm1136 = vcmp.eq.f32.partialorder %v1116, inf
    %v1137 = vsel %vm1136, %v1116, %v1135
    %vm1138 = vcmp.eq.f32.partialorder %v1116, 0.0
    %v1139 = vand.u32 %v1116, 2147483648
    %v1140 = vsel %vm1138, %v1139, %v1137
    %v1141 = vrsqrt.pop %v1119
    %v1142 = vmul.f32 %v1119, %v1141
    %vm1143 = vcmp.eq.f32.partialorder %v1119, inf
    %v1144 = vsel %vm1143, %v1119, %v1142
    %vm1145 = vcmp.eq.f32.partialorder %v1119, 0.0
    %v1146 = vand.u32 %v1119, 2147483648
    %v1147 = vsel %vm1145, %v1146, %v1144
    %v1148 = vmul.f32 %v1126, 0.25
    %v1149 = vmul.f32 %v1133, 0.25
    %v1150 = vmul.f32 %v1140, 0.25
    %v1151 = vmul.f32 %v1147, 0.25
    %v1152 = vadd.f32 %v1148, 1e-05
    %v1153 = vadd.f32 %v1149, 1e-05
    %v1154 = vadd.f32 %v1150, 1e-05
    %v1155 = vadd.f32 %v1151, 1e-05
    %v1156 = vrcp.pop %v1152
    %v1157 = vrcp.pop %v1153
    %v1158 = vrcp.pop %v1154
    %v1159 = vrcp.pop %v1155
    %v1160 = vmul.f32 %v1100, %v1156
    %v1161 = vmul.f32 %v1101, %v1157
    %v1162 = vmul.f32 %v1102, %v1158
    %v1163 = vmul.f32 %v1103, %v1159
    %vm1164 = vcmp.ge.f32.partialorder %v1160, 0.0
    %vm1165 = vcmp.ge.f32.partialorder %v1161, 0.0
    %vm1166 = vcmp.ge.f32.partialorder %v1162, 0.0
    %vm1167 = vcmp.ge.f32.partialorder %v1163, 0.0
    %v1168 = vmul.f32 %v1160, 0.02
    %v1169 = vmul.f32 %v1161, 0.02
    %v1170 = vmul.f32 %v1162, 0.02
    %v1171 = vmul.f32 %v1163, 0.02
    %v1172 = vsel %vm1164, %v1160, %v1168
    %v1173 = vsel %vm1165, %v1161, %v1169
    %v1174 = vsel %vm1166, %v1162, %v1170
    %v1175 = vsel %vm1167, %v1163, %v1171
    %v1177 = vsel %vm451, %v1172, 0
    %v1180 = vsel %vm451, %v1173, 0
    %v1183 = vsel %vm451, %v1174, 0
    %v1186 = vsel %vm451, %v1175, 0
    %1188 = vmatprep.subr.mxu0 0.0
    %1189 = vmatpush1.msra.mxu0 %v68
    %1190 = vmatprep.subr.mxu0 0.0
    %1191 = vmatpush1.msra.mxu0 %v69
    %1192 = vmatprep.subr.mxu0 0.0
    %1193 = vmatpush1.msra.mxu0 0.0
    %1194 = vmatprep.subr.mxu0 0.0
    %1195 = vmatpush1.msra.mxu0 0.0
    %1196 = vmatprep.subr.mxu0 0.0
    %1197 = vmatpush1.msra.mxu0 0.0
    %1198 = vmatprep.subr.mxu0 0.0
    %1199 = vmatpush1.msra.mxu0 0.0
    %1200 = vmatprep.subr.mxu0 0.0
    %1201 = vmatpush1.msra.mxu0 0.0
    %1202 = vmatprep.subr.mxu0 0.0
    %1203 = vmatpush1.msra.mxu0 0.0
    %1204 = vmatprep.subr.mxu0 0.0
    %1205 = vmatpush1.msra.mxu0 0.0
    %1206 = vmatprep.subr.mxu0 0.0
    %1207 = vmatpush1.msra.mxu0 0.0
    %1208 = vmatprep.subr.mxu0 0.0
    %1209 = vmatpush1.msra.mxu0 0.0
    %1210 = vmatprep.subr.mxu0 0.0
    %1211 = vmatpush1.msra.mxu0 0.0
    %1212 = vmatprep.subr.mxu0 0.0
    %1213 = vmatpush1.msra.mxu0 0.0
    %1214 = vmatprep.subr.mxu0 0.0
    %1215 = vmatpush1.msra.mxu0 0.0
    %1216 = vmatprep.subr.mxu0 0.0
    %1217 = vmatpush1.msra.mxu0 0.0
    %1218 = vmatprep.subr.mxu0 0.0
    %1219 = vmatpush1.msra.mxu0 0.0
    %1220 = vmatprep.subr.mxu0 0.0
    %1221 = vmatpush1.msra.mxu0 0.0
    %1222 = vmatprep.subr.mxu0 0.0
    %1223 = vmatpush1.msra.mxu0 0.0
    %1224 = vmatprep.subr.mxu0 0.0
    %1225 = vmatpush1.msra.mxu0 0.0
    %1226 = vmatprep.subr.mxu0 0.0
    %1227 = vmatpush1.msra.mxu0 0.0
    %1228 = vmatprep.subr.mxu0 0.0
    %1229 = vmatpush1.msra.mxu0 0.0
    %1230 = vmatprep.subr.mxu0 0.0
    %1231 = vmatpush1.msra.mxu0 0.0
    %1232 = vmatprep.subr.mxu0 0.0
    %1233 = vmatpush1.msra.mxu0 0.0
    %1234 = vmatprep.subr.mxu0 0.0
    %1235 = vmatpush1.msra.mxu0 0.0
    %1236 = vmatprep.subr.mxu0 0.0
    %1237 = vmatpush1.msra.mxu0 0.0
    %1238 = vmatprep.subr.mxu0 0.0
    %1239 = vmatpush1.msra.mxu0 0.0
    %1240 = vmatprep.subr.mxu0 0.0
    %1241 = vmatpush1.msra.mxu0 0.0
    %1242 = vmatprep.subr.mxu0 0.0
    %1243 = vmatpush1.msra.mxu0 0.0
    %1244 = vmatprep.subr.mxu0 0.0
    %1245 = vmatpush1.msra.mxu0 0.0
    %1246 = vmatprep.subr.mxu0 0.0
    %1247 = vmatpush1.msra.mxu0 0.0
    %1248 = vmatprep.subr.mxu0 0.0
    %1249 = vmatpush1.msra.mxu0 0.0
    %1250 = vmatprep.subr.mxu0 0.0
    %1251 = vmatpush1.msra.mxu0 0.0
    %1252 = vmatprep.mubr.f32.mxu0 0.0
    %1253 = vmatmul.mubr.f32.gmra.mrb[0].mxu0 %v1177
    %v1254 = vpop.f32.mrb[0].mxu0
    %v1255 = vadd.f32 0.0, %v1254
    %v1256 = vpop.f32.mrb[0].mxu0
    %1257 = vmatprep.mubr.f32.mxu0 0.0
    %1258 = vmatmul.mubr.f32.gmra.mrb[0].mxu0 %v1180
    %v1259 = vpop.f32.mrb[0].mxu0
    %v1260 = vadd.f32 0.0, %v1259
    %v1261 = vpop.f32.mrb[0].mxu0
    %1262 = vmatprep.mubr.f32.mxu0 0.0
    %1263 = vmatmul.mubr.f32.gmra.mrb[0].mxu0 %v1183
    %v1264 = vpop.f32.mrb[0].mxu0
    %v1265 = vadd.f32 0.0, %v1264
    %v1266 = vpop.f32.mrb[0].mxu0
    %1267 = vmatprep.mubr.f32.mxu0 0.0
    %1268 = vmatmul.mubr.f32.gmra.mrb[0].mxu0 %v1186
    %v1269 = vpop.f32.mrb[0].mxu0
    %v1270 = vadd.f32 0.0, %v1269
    %v1271 = vpop.f32.mrb[0].mxu0
    %1272 = vdwg.mxu0
    %v1273 = vstv %s70
    %v1274 = vmul.f32 %v1255, %v1273
    %v1275 = vmul.f32 %v1260, %v1273
    %v1276 = vmul.f32 %v1265, %v1273
    %v1277 = vmul.f32 %v1270, %v1273
    %v1278 = vadd.f32 %v56, %v1274
    %v1279 = vadd.f32 %v57, %v1275
    %v1280 = vadd.f32 %v58, %v1276
    %v1281 = vadd.f32 %v59, %v1277
    %v1282 = vstv %s71
    %v1283 = vmul.f32 %v1282, %v1278
    %v1284 = vmul.f32 %v1282, %v1279
    %v1285 = vmul.f32 %v1282, %v1280
    %v1286 = vmul.f32 %v1282, %v1281
    %v1287 = vadd.f32 %v60, %v1283
    %v1288 = vadd.f32 %v61, %v1284
    %v1289 = vadd.f32 %v62, %v1285
    %v1290 = vadd.f32 %v63, %v1286
    %1291 = vst.msk [vmem:[#allocation5] sm:$0xff] %vm73, %v1278
    %1292 = vst.msk [vmem:[#allocation5 + $0x8] sm:$0xff] %vm73, %v1279
    %1293 = vst.msk [vmem:[#allocation5 + $0x10] sm:$0xff] %vm73, %v1280
    %1294 = vst.msk [vmem:[#allocation5 + $0x18] sm:$0xff] %vm73, %v1281
    %1295 = vst.msk [vmem:[#allocation6] sm:$0xff] %vm73, %v1287
    %1296 = vst.msk [vmem:[#allocation6 + $0x8] sm:$0xff] %vm73, %v1288
    %1297 = vst.msk [vmem:[#allocation6 + $0x10] sm:$0xff] %vm73, %v1289
    %1298 = vst.msk [vmem:[#allocation6 + $0x18] sm:$0xff] %vm73, %v1290
    %v1299 = vld [vmem:[%s8] sm:$0xff]
    %v1300 = vld [vmem:[%s9] sm:$0xff]
    %v1302 = vsel %vm73, %v1287, 0
    %v1305 = vsel %vm73, %v1288, 0
    %v1308 = vsel %vm73, %v1289, 0
    %v1311 = vsel %vm73, %v1290, 0
    %1313 = vmatprep.subr.mxu0 0.0
    %1314 = vmatpush1.msra.mxu0 %v1300
    %1315 = vmatprep.subr.mxu0 0.0
    %1316 = vmatpush1.msra.mxu0 0.0
    %1317 = vmatprep.subr.mxu0 0.0
    %1318 = vmatpush1.msra.mxu0 0.0
    %1319 = vmatprep.subr.mxu0 0.0
    %1320 = vmatpush1.msra.mxu0 0.0
    %1321 = vmatprep.subr.mxu0 0.0
    %1322 = vmatpush1.msra.mxu0 0.0
    %1323 = vmatprep.subr.mxu0 0.0
    %1324 = vmatpush1.msra.mxu0 0.0
    %1325 = vmatprep.subr.mxu0 0.0
    %1326 = vmatpush1.msra.mxu0 0.0
    %1327 = vmatprep.subr.mxu0 0.0
    %1328 = vmatpush1.msra.mxu0 0.0
    %1329 = vmatprep.subr.mxu0 0.0
    %1330 = vmatpush1.msra.mxu0 0.0
    %1331 = vmatprep.subr.mxu0 0.0
    %1332 = vmatpush1.msra.mxu0 0.0
    %1333 = vmatprep.subr.mxu0 0.0
    %1334 = vmatpush1.msra.mxu0 0.0
    %1335 = vmatprep.subr.mxu0 0.0
    %1336 = vmatpush1.msra.mxu0 0.0
    %1337 = vmatprep.subr.mxu0 0.0
    %1338 = vmatpush1.msra.mxu0 0.0
    %1339 = vmatprep.subr.mxu0 0.0
    %1340 = vmatpush1.msra.mxu0 0.0
    %1341 = vmatprep.subr.mxu0 0.0
    %1342 = vmatpush1.msra.mxu0 0.0
    %1343 = vmatprep.subr.mxu0 0.0
    %1344 = vmatpush1.msra.mxu0 0.0
    %1345 = vmatprep.subr.mxu0 0.0
    %1346 = vmatpush1.msra.mxu0 0.0
    %1347 = vmatprep.subr.mxu0 0.0
    %1348 = vmatpush1.msra.mxu0 0.0
    %1349 = vmatprep.subr.mxu0 0.0
    %1350 = vmatpush1.msra.mxu0 0.0
    %1351 = vmatprep.subr.mxu0 0.0
    %1352 = vmatpush1.msra.mxu0 0.0
    %1353 = vmatprep.subr.mxu0 0.0
    %1354 = vmatpush1.msra.mxu0 0.0
    %1355 = vmatprep.subr.mxu0 0.0
    %1356 = vmatpush1.msra.mxu0 0.0
    %1357 = vmatprep.subr.mxu0 0.0
    %1358 = vmatpush1.msra.mxu0 0.0
    %1359 = vmatprep.subr.mxu0 0.0
    %1360 = vmatpush1.msra.mxu0 0.0
    %1361 = vmatprep.subr.mxu0 0.0
    %1362 = vmatpush1.msra.mxu0 0.0
    %1363 = vmatprep.subr.mxu0 0.0
    %1364 = vmatpush1.msra.mxu0 0.0
    %1365 = vmatprep.subr.mxu0 0.0
    %1366 = vmatpush1.msra.mxu0 0.0
    %1367 = vmatprep.subr.mxu0 0.0
    %1368 = vmatpush1.msra.mxu0 0.0
    %1369 = vmatprep.subr.mxu0 0.0
    %1370 = vmatpush1.msra.mxu0 0.0
    %1371 = vmatprep.subr.mxu0 0.0
    %1372 = vmatpush1.msra.mxu0 0.0
    %1373 = vmatprep.subr.mxu0 0.0
    %1374 = vmatpush1.msra.mxu0 0.0
    %1375 = vmatprep.subr.mxu0 0.0
    %1376 = vmatpush1.msra.mxu0 0.0
    %1377 = vmatprep.mubr.f32.mxu0 0.0
    %1378 = vmatmul.mubr.f32.gmra.mrb[0].mxu0 %v1302
    %v1379 = vpop.f32.mrb[0].mxu0
    %v1380 = vadd.f32 0.0, %v1379
    %v1381 = vpop.f32.mrb[0].mxu0
    %1382 = vmatprep.mubr.f32.mxu0 0.0
    %1383 = vmatmul.mubr.f32.gmra.mrb[0].mxu0 %v1305
    %v1384 = vpop.f32.mrb[0].mxu0
    %v1385 = vadd.f32 0.0, %v1384
    %v1386 = vpop.f32.mrb[0].mxu0
    %1387 = vmatprep.mubr.f32.mxu0 0.0
    %1388 = vmatmul.mubr.f32.gmra.mrb[0].mxu0 %v1308
    %v1389 = vpop.f32.mrb[0].mxu0
    %v1390 = vadd.f32 0.0, %v1389
    %v1391 = vpop.f32.mrb[0].mxu0
    %1392 = vmatprep.mubr.f32.mxu0 0.0
    %1393 = vmatmul.mubr.f32.gmra.mrb[0].mxu0 %v1311
    %v1394 = vpop.f32.mrb[0].mxu0
    %v1395 = vadd.f32 0.0, %v1394
    %v1396 = vpop.f32.mrb[0].mxu0
    %1397 = vdwg.mxu0
    %v1399 = vsel %vm73, %v1278, 0
    %v1402 = vsel %vm73, %v1279, 0
    %v1405 = vsel %vm73, %v1280, 0
    %v1408 = vsel %vm73, %v1281, 0
    %1410 = vmatprep.subr.mxu0 0.0
    %1411 = vmatpush1.msra.mxu0 %v1299
    %1412 = vmatprep.subr.mxu0 0.0
    %1413 = vmatpush1.msra.mxu0 0.0
    %1414 = vmatprep.subr.mxu0 0.0
    %1415 = vmatpush1.msra.mxu0 0.0
    %1416 = vmatprep.subr.mxu0 0.0
    %1417 = vmatpush1.msra.mxu0 0.0
    %1418 = vmatprep.subr.mxu0 0.0
    %1419 = vmatpush1.msra.mxu0 0.0
    %1420 = vmatprep.subr.mxu0 0.0
    %1421 = vmatpush1.msra.mxu0 0.0
    %1422 = vmatprep.subr.mxu0 0.0
    %1423 = vmatpush1.msra.mxu0 0.0
    %1424 = vmatprep.subr.mxu0 0.0
    %1425 = vmatpush1.msra.mxu0 0.0
    %1426 = vmatprep.subr.mxu0 0.0
    %1427 = vmatpush1.msra.mxu0 0.0
    %1428 = vmatprep.subr.mxu0 0.0
    %1429 = vmatpush1.msra.mxu0 0.0
    %1430 = vmatprep.subr.mxu0 0.0
    %1431 = vmatpush1.msra.mxu0 0.0
    %1432 = vmatprep.subr.mxu0 0.0
    %1433 = vmatpush1.msra.mxu0 0.0
    %1434 = vmatprep.subr.mxu0 0.0
    %1435 = vmatpush1.msra.mxu0 0.0
    %1436 = vmatprep.subr.mxu0 0.0
    %1437 = vmatpush1.msra.mxu0 0.0
    %1438 = vmatprep.subr.mxu0 0.0
    %1439 = vmatpush1.msra.mxu0 0.0
    %1440 = vmatprep.subr.mxu0 0.0
    %1441 = vmatpush1.msra.mxu0 0.0
    %1442 = vmatprep.subr.mxu0 0.0
    %1443 = vmatpush1.msra.mxu0 0.0
    %1444 = vmatprep.subr.mxu0 0.0
    %1445 = vmatpush1.msra.mxu0 0.0
    %1446 = vmatprep.subr.mxu0 0.0
    %1447 = vmatpush1.msra.mxu0 0.0
    %1448 = vmatprep.subr.mxu0 0.0
    %1449 = vmatpush1.msra.mxu0 0.0
    %1450 = vmatprep.subr.mxu0 0.0
    %1451 = vmatpush1.msra.mxu0 0.0
    %1452 = vmatprep.subr.mxu0 0.0
    %1453 = vmatpush1.msra.mxu0 0.0
    %1454 = vmatprep.subr.mxu0 0.0
    %1455 = vmatpush1.msra.mxu0 0.0
    %1456 = vmatprep.subr.mxu0 0.0
    %1457 = vmatpush1.msra.mxu0 0.0
    %1458 = vmatprep.subr.mxu0 0.0
    %1459 = vmatpush1.msra.mxu0 0.0
    %1460 = vmatprep.subr.mxu0 0.0
    %1461 = vmatpush1.msra.mxu0 0.0
    %1462 = vmatprep.subr.mxu0 0.0
    %1463 = vmatpush1.msra.mxu0 0.0
    %1464 = vmatprep.subr.mxu0 0.0
    %1465 = vmatpush1.msra.mxu0 0.0
    %1466 = vmatprep.subr.mxu0 0.0
    %1467 = vmatpush1.msra.mxu0 0.0
    %1468 = vmatprep.subr.mxu0 0.0
    %1469 = vmatpush1.msra.mxu0 0.0
    %1470 = vmatprep.subr.mxu0 0.0
    %1471 = vmatpush1.msra.mxu0 0.0
    %1472 = vmatprep.subr.mxu0 0.0
    %1473 = vmatpush1.msra.mxu0 0.0
    %1474 = vmatprep.mubr.f32.mxu0 0.0
    %1475 = vmatmul.mubr.f32.gmra.mrb[0].mxu0 %v1399
    %v1476 = vpop.f32.mrb[0].mxu0
    %v1477 = vadd.f32 %v1380, %v1476
    %v1478 = vpop.f32.mrb[0].mxu0
    %1479 = vmatprep.mubr.f32.mxu0 0.0
    %1480 = vmatmul.mubr.f32.gmra.mrb[0].mxu0 %v1402
    %v1481 = vpop.f32.mrb[0].mxu0
    %v1482 = vadd.f32 %v1385, %v1481
    %v1483 = vpop.f32.mrb[0].mxu0
    %1484 = vmatprep.mubr.f32.mxu0 0.0
    %1485 = vmatmul.mubr.f32.gmra.mrb[0].mxu0 %v1405
    %v1486 = vpop.f32.mrb[0].mxu0
    %v1487 = vadd.f32 %v1390, %v1486
    %v1488 = vpop.f32.mrb[0].mxu0
    %1489 = vmatprep.mubr.f32.mxu0 0.0
    %1490 = vmatmul.mubr.f32.gmra.mrb[0].mxu0 %v1408
    %v1491 = vpop.f32.mrb[0].mxu0
    %v1492 = vadd.f32 %v1395, %v1491
    %v1493 = vpop.f32.mrb[0].mxu0
    %1494 = vdwg.mxu0
    %v1495 = vld [vmem:[%s10] sm:$0x1]
    %v1497 = vlaneseq
    %v1498 = vshrl.u32 %v1497, 7
    %v1499 = vsub.s32 0, %v1498
    %v1500 = vrot.slane %v1495, %v1499
    %v1502 = vadd.f32 %v1477, %v1500
    %v1503 = vadd.f32 %v1482, %v1500
    %v1504 = vadd.f32 %v1487, %v1500
    %v1505 = vadd.f32 %v1492, %v1500
    %vm1506 = vcmask 89088
    %1507 = vst.msk [vmem:[%s11] sm:$0xff] %vm1506, %v1502
    %1508 = vst.msk [vmem:[%s11 + $0x8] sm:$0xff] %vm1506, %v1503
    %1509 = vst.msk [vmem:[%s11 + $0x10] sm:$0xff] %vm1506, %v1504
    %1510 = vst.msk [vmem:[%s11 + $0x18] sm:$0xff] %vm1506, %v1505
    // Predicated region
    $region50: #{_lambda_.1} parent=1 // pred_check
      _
    $region51: #{_lambda_.1} parent=1 // pred_check_branch
      %1512 = sbr.rel (0) target = $region53
    $region52: #{_lambda_.1} parent=1 // pred_region
      _
    $region53: #{_lambda_.1} parent=1 // pred_fallthru
      _
    // Predicated region
    $region54: #{_lambda_.1} parent=1 // pred_check
      _
    $region55: #{_lambda_.1} parent=1 // pred_check_branch
      %1514 = sbr.rel (0) target = $region57
    $region56: #{_lambda_.1} parent=1 // pred_region
      %s1516 = ssub.s32 512, 512
      %1517 = vsyncadd [#allocation3], %s1516
      %s1518 = sshll.u32 [#allocation5], 4
      %s1519 = int_to_ptr.vmem [resolvable:$true] %s1518
      %1524 = dma.vmem_to_hbm [thread:$0]  %s1519, 512, %s12, [#allocation3], 128, 128, 8
    $region57: #{_lambda_.1} parent=1 // pred_fallthru
      _
    // Predicated region
    $region58: #{_lambda_.1} parent=1 // pred_check
      _
    $region59: #{_lambda_.1} parent=1 // pred_check_branch
      %1526 = sbr.rel (0) target = $region61
    $region60: #{_lambda_.1} parent=1 // pred_region
      %s1528 = ssub.s32 512, 512
      %1529 = vsyncadd [#allocation7], %s1528
      %s1530 = sshll.u32 [#allocation6], 4
      %s1531 = int_to_ptr.vmem [resolvable:$true] %s1530
      %1536 = dma.vmem_to_hbm [thread:$0]  %s1531, 512, %s13, [#allocation7], 128, 128, 8
    $region61: #{_lambda_.1} parent=1 // pred_fallthru
      _
    // Predicated region
    $region62: #{_lambda_.1} parent=1 // pred_check
      _
    $region63: #{_lambda_.1} parent=1 // pred_check_branch
      %1538 = sbr.rel (0) target = $region65
    $region64: #{_lambda_.1} parent=1 // pred_region
      _
    $region65: #{_lambda_.1} parent=1 // pred_fallthru
      _
    // Predicated region
    $region66: #{_lambda_.1} parent=1 // pred_check
      _
    $region67: #{_lambda_.1} parent=1 // pred_check_branch
      %1540 = sbr.rel (0) target = $region69
    $region68: #{_lambda_.1} parent=1 // pred_region
      %1541 = dma.done [#allocation3], 512
    $region69: #{_lambda_.1} parent=1 // pred_fallthru
      _
    // Predicated region
    $region70: #{_lambda_.1} parent=1 // pred_check
      _
    $region71: #{_lambda_.1} parent=1 // pred_check_branch
      %1543 = sbr.rel (0) target = $region73
    $region72: #{_lambda_.1} parent=1 // pred_region
      %1544 = dma.done [#allocation7], 512
    $region73: #{_lambda_.1} parent=1 // pred_fallthru
      _
    %1545 = vsyncpa [#allocation3], 1
    %1546 = vsyncpa [#allocation7], 1
    %1547 = vsyncpa [#allocation4], 1

</llo_original>
